<compile_context>
chip_gen: v6e
topology: v6e:2x2x1
jax: 0.10.0
libtpu: 0.0.40
codegen_flags: <defaults>
</compile_context>

<pallas_src>
import functools

import jax
import jax.numpy as jnp
from jax import lax
from jax.experimental import pallas as pl
from jax.experimental.pallas import tpu as pltpu

NUM_LAYERS = 6
HIDDEN = 16
C_PAD = 128                      # lane-dense output width
_NEG = -1e30                     # bias for padded class columns (exp -> 0, f32 only)


def _round_up(v, m):
    return (v + m - 1) // m * m


def _device_kind():
    try:
        return jax.devices()[0].device_kind.lower()
    except Exception:
        return ""


def _is_v5e():
    k = _device_kind()
    return ("v5e" in k) or ("v5 lite" in k) or ("v5lite" in k)


def _is_v7():
    k = _device_kind()
    return ("v7" in k) or ("7x" in k)


@functools.lru_cache(maxsize=1)
def _vmem_limit_bytes():
    """Generation-aware scoped-VMEM request: ~80% of physical VMEM."""
    cap = None
    try:
        cap = getattr(pltpu.get_tpu_info(), "vmem_capacity_bytes", None)
    except Exception:
        cap = None
    if not cap:
        cap = (64 if _is_v7() else 128) * 1024 * 1024
    return int(cap * 0.8)


def _const_index(nd):
    return lambda i: (0,) * nd


# ---------------------------------------------------------------------------
# One-time input preparation (hoisted out of the per-call forward).
# ---------------------------------------------------------------------------
def prepare_jknet_inputs(a_hat, x, w0, b0, ws, bs, wfc, bfc):
    """Pad N to a multiple of 128, pad classes to C_PAD, cast MXU inputs to
    bf16.  Call once per graph and reuse; the Np^2-scale pad+cast must not run
    inside the per-call forward."""
    n, f = x.shape
    c = wfc.shape[1]
    n_pad = _round_up(max(n, 8), 128)
    # Padded A rows/cols are zero so they never leak into real rows.
    a_p = jnp.zeros((n_pad, n_pad), jnp.float32).at[:n, :n].set(a_hat)
    x_p = jnp.zeros((n_pad, f), jnp.float32).at[:n, :].set(x)
    b_all = jnp.concatenate([b0[None], bs], axis=0).astype(jnp.float32)
    # Lane-dense fc: padded logits get a huge negative bias (f32 only!).
    wfc_p = jnp.zeros((wfc.shape[0], C_PAD), jnp.float32).at[:, :c].set(wfc)
    bfc_p = jnp.full((1, C_PAD), _NEG, jnp.float32).at[:, :c].set(bfc)
    return dict(
        a=a_p.astype(jnp.bfloat16), x=x_p.astype(jnp.bfloat16),
        w0=w0.astype(jnp.bfloat16), ws=ws.astype(jnp.bfloat16),
        b=b_all, wfc=wfc_p.astype(jnp.bfloat16), bfc=bfc_p,
        n=n, c=c, n_pad=n_pad)


# ---------------------------------------------------------------------------
# Path 1: fully fused kernel.  A is single-buffered in a VMEM scratch via one
# manual DMA, overlapped with x @ w0; it stays resident for all 6 layers.
# ---------------------------------------------------------------------------
def _jknet_fused_kernel(a_hbm, x_ref, w0_ref, ws_ref, b_ref, wfc_ref, bfc_ref,
                        out_ref, a_vmem, a_sem):
    # Start the big A HBM->VMEM copy; overlap with the A-independent matmul.
    cp = pltpu.make_async_copy(a_hbm, a_vmem, a_sem)
    cp.start()
    t = jnp.dot(x_ref[...], w0_ref[...], preferred_element_type=jnp.float32)
    cp.wait()
    a = a_vmem[...]                                     # bf16, resident 6 layers

    # layer 0
    z = jnp.dot(a, t.astype(jnp.bfloat16), preferred_element_type=jnp.float32)
    h = jnp.maximum(z + b_ref[0], 0.0)                  # f32
    jk = h                                              # running JK max (f32)

    # layers 1 .. L-1
    for i in range(NUM_LAYERS - 1):
        t = jnp.dot(h.astype(jnp.bfloat16), ws_ref[i],
                    preferred_element_type=jnp.float32)
        z = jnp.dot(a, t.astype(jnp.bfloat16),
                    preferred_element_type=jnp.float32)
        h = jnp.maximum(z + b_ref[i + 1], 0.0)
        jk = jnp.maximum(jk, h)

    # fc + log_softmax; padded to C_PAD lanes -> lane-dense store.
    logits = jnp.dot(jk.astype(jnp.bfloat16), wfc_ref[...],
                     preferred_element_type=jnp.float32) + bfc_ref[...]
    m = jnp.max(logits, axis=1, keepdims=True)
    lse = m + jnp.log(jnp.sum(jnp.exp(logits - m), axis=1, keepdims=True))
    out_ref[...] = logits - lse


@jax.jit
def _fused_forward(a_b, x_b, w0_b, ws_b, b_all, wfc_p, bfc_p):
    n_pad = a_b.shape[0]
    dense = (x_b, w0_b, ws_b, b_all, wfc_p, bfc_p)
    in_specs = [pl.BlockSpec(memory_space=pl.ANY)]       # A stays in HBM
    in_specs += [pl.BlockSpec(v.shape, _const_index(v.ndim)) for v in dense]
    return pl.pallas_call(
        _jknet_fused_kernel,
        out_shape=jax.ShapeDtypeStruct((n_pad, C_PAD), jnp.float32),
        grid_spec=pltpu.PrefetchScalarGridSpec(
            num_scalar_prefetch=0,
            grid=(1,),
            in_specs=in_specs,
            out_specs=pl.BlockSpec((n_pad, C_PAD), lambda i: (0, 0)),
            scratch_shapes=[pltpu.VMEM((n_pad, n_pad), jnp.bfloat16),
                            pltpu.SemaphoreType.DMA]),
        compiler_params=pltpu.CompilerParams(
            dimension_semantics=("arbitrary",),
            vmem_limit_bytes=_vmem_limit_bytes()),
    )(a_b, *dense)


# ---------------------------------------------------------------------------
# Path 2: single pallas_call, grid = (layers, row_tiles).  A row tiles are
# streamed per (layer, tile); h / jk / t live in persistent VMEM scratch, and
# fc + log_softmax is fused into the last layer's tiles.
# ---------------------------------------------------------------------------
def _jknet_tiled_kernel(a_ref, x_ref, w0_ref, ws_ref, b_ref, wfc_ref, bfc_ref,
                        out_ref, h_buf, jk_buf, t_buf):
    l = pl.program_id(0)
    i = pl.program_id(1)
    tile = a_ref.shape[0]
    rows = pl.ds(pl.multiple_of(i * tile, tile), tile)

    # t = h_{l-1} @ W_l for the whole graph, computed once per layer (tile 0).
    @pl.when(i == 0)
    def _():
        @pl.when(l == 0)
        def _():
            t_buf[...] = jnp.dot(
                x_ref[...], w0_ref[...],
                preferred_element_type=jnp.float32).astype(jnp.bfloat16)

        @pl.when(l > 0)
        def _():
            h_prev = h_buf[lax.rem(l + 1, 2)]            # slot (l-1) % 2
            t_buf[...] = jnp.dot(
                h_prev, ws_ref[l - 1],
                preferred_element_type=jnp.float32).astype(jnp.bfloat16)

    # Aggregate this row tile: A[rows, :] @ t, bias, relu.
    z = jnp.dot(a_ref[...], t_buf[...],
                preferred_element_type=jnp.float32) + b_ref[l]
    h_new = jnp.maximum(z, 0.0)                          # (tile, H) f32
    h_buf[lax.rem(l, 2), rows, :] = h_new.astype(jnp.bfloat16)

    # JumpingKnowledge('max') running maximum, VMEM-resident (no HBM roundtrip).
    @pl.when(l == 0)
    def _():
        jk_buf[rows, :] = h_new

    @pl.when(l > 0)
    def _():
        jk_buf[rows, :] = jnp.maximum(jk_buf[rows, :], h_new)

    # Last GCN layer: jk for this tile is final -> fused fc + log_softmax.
    # (For l < L-1 the output block is left untouched; the stale writebacks are
    #  overwritten by the final layer's stores, so the HBM result is correct.)
    @pl.when(l == NUM_LAYERS - 1)
    def _():
        logits = jnp.dot(jk_buf[rows, :].astype(jnp.bfloat16), wfc_ref[...],
                         preferred_element_type=jnp.float32) + bfc_ref[...]
        m = jnp.max(logits, axis=1, keepdims=True)
        lse = m + jnp.log(jnp.sum(jnp.exp(logits - m), axis=1, keepdims=True))
        out_ref[...] = logits - lse


def _pick_tile(n_pad, vmem_limit, a_buffers):
    """Largest power-of-two row tile whose pipelined A buffers + output buffers
    fit the VMEM budget next to the resident h/jk/t scratch."""
    resident = 3 * n_pad * HIDDEN * 2 + n_pad * HIDDEN * 4 + (2 << 20)
    budget = max(vmem_limit - resident, 1 << 20)
    for t in (2048, 1024, 512, 256, 128):
        if t <= n_pad and n_pad % t == 0:
            need = a_buffers * t * n_pad * 2 + 2 * t * C_PAD * 4
            if need <= budget:
                return t
    return 128


@jax.jit
def _tiled_forward(a_b, x_b, w0_b, ws_b, b_all, wfc_p, bfc_p):
    n_pad = a_b.shape[0]
    f = x_b.shape[1]
    vlim = _vmem_limit_bytes()
    a_buffers = 3 if _is_v5e() else 2        # deeper A pipelining on v5e HBM
    tile = _pick_tile(n_pad, vlim, a_buffers)
    a_kwargs = {}
    if a_buffers != 2 and hasattr(pl, "Buffered"):
        a_kwargs["pipeline_mode"] = pl.Buffered(a_buffers)

    return pl.pallas_call(
        _jknet_tiled_kernel,
        out_shape=jax.ShapeDtypeStruct((n_pad, C_PAD), jnp.float32),
        grid_spec=pltpu.PrefetchScalarGridSpec(
            num_scalar_prefetch=0,
            grid=(NUM_LAYERS, n_pad // tile),
            in_specs=[
                pl.BlockSpec((tile, n_pad), lambda l, i: (i, 0), **a_kwargs),
                pl.BlockSpec((n_pad, f), lambda l, i: (0, 0)),       # x (layer 0)
                pl.BlockSpec(w0_b.shape, lambda l, i: (0, 0)),
                pl.BlockSpec(ws_b.shape, lambda l, i: (0, 0, 0)),
                pl.BlockSpec(b_all.shape, lambda l, i: (0, 0, 0)),
                pl.BlockSpec(wfc_p.shape, lambda l, i: (0, 0)),
                pl.BlockSpec(bfc_p.shape, lambda l, i: (0, 0)),
            ],
            out_specs=pl.BlockSpec((tile, C_PAD), lambda l, i: (i, 0)),
            scratch_shapes=[
                pltpu.VMEM((2, n_pad, HIDDEN), jnp.bfloat16),  # h ping-pong
                pltpu.VMEM((n_pad, HIDDEN), jnp.float32),      # JK running max
                pltpu.VMEM((n_pad, HIDDEN), jnp.bfloat16),     # t = h @ W
            ]),
        compiler_params=pltpu.CompilerParams(
            # Both axes sequential: VMEM-resident h/jk must stay coherent on a
            # single core.  TODO(synk): v7x megacore needs a core_map split.
            dimension_semantics=("arbitrary", "arbitrary"),
            vmem_limit_bytes=vlim),
    )(a_b, x_b, w0_b, ws_b, b_all, wfc_p, bfc_p)


# ---------------------------------------------------------------------------
# Dispatcher.
# ---------------------------------------------------------------------------
def jknet_forward(prep, path="auto"):
    """prep = prepare_jknet_inputs(...).  path in {'auto','fused','tiled'}."""
    args = (prep["a"], prep["x"], prep["w0"], prep["ws"], prep["b"],
            prep["wfc"], prep["bfc"])
    if path == "auto":
        n_pad = prep["n_pad"]
        f = prep["x"].shape[1]
        fused_bytes = (2 * n_pad * n_pad + 4 * n_pad * f
                       + 8 * n_pad * C_PAD + (2 << 20))
        # v7x: prefer the streaming path (halved VMEM, 3.2 TB/s makes
        # re-streaming A cheap, and the fused grid=(1,) uses only one core).
        if _is_v7() or fused_bytes > int(0.85 * _vmem_limit_bytes()):
            path = "tiled"
        else:
            path = "fused"
    out_pad = (_fused_forward if path == "fused" else _tiled_forward)(*args)
    return out_pad[:prep["n"], :prep["c"]]


# ---------------------------------------------------------------------------
# Host-side helpers and references.
# ---------------------------------------------------------------------------
def build_normalized_adjacency(edge_index, num_nodes):
    """Dense GCN normalization: A_hat = D^{-1/2} (A + I) D^{-1/2}."""
    src, dst = edge_index
    a = jnp.zeros((num_nodes, num_nodes), jnp.float32)
    a = a.at[src, dst].set(1.0)
    a = a.at[dst, src].set(1.0)
    a = a + jnp.eye(num_nodes, dtype=jnp.float32)
    a = jnp.minimum(a, 1.0)
    deg = jnp.sum(a, axis=1)
    dinv = 1.0 / jnp.sqrt(jnp.maximum(deg, 1.0))
    return a * dinv[:, None] * dinv[None, :]


def log_softmax_ref(z):
    m = jnp.max(z, axis=1, keepdims=True)
    return z - (m + jnp.log(jnp.sum(jnp.exp(z - m), axis=1, keepdims=True)))


def jknet_ref(a_hat, x, w0, b0, ws, bs, wfc, bfc):
    """Pure-JAX f32 reference."""
    h = jnp.maximum(a_hat @ (x @ w0) + b0, 0.0)
    jk = h
    for i in range(NUM_LAYERS - 1):
        h = jnp.maximum(a_hat @ (h @ ws[i]) + bs[i], 0.0)
        jk = jnp.maximum(jk, h)
    return log_softmax_ref(jk @ wfc + bfc)


def jknet_ref_mixed(a_hat, x, w0, b0, ws, bs, wfc, bfc):
    """Pure-JAX reference with the same bf16-MXU / f32-accumulate precision."""
    bf = jnp.bfloat16
    a = a_hat.astype(bf)
    t = jnp.dot(x.astype(bf), w0.astype(bf), preferred_element_type=jnp.float32)
    h = jnp.maximum(
        jnp.dot(a, t.astype(bf), preferred_element_type=jnp.float32) + b0, 0.0)
    jk = h
    for i in range(NUM_LAYERS - 1):
        t = jnp.dot(h.astype(bf), ws[i].astype(bf),
                    preferred_element_type=jnp.float32)
        h = jnp.maximum(
            jnp.dot(a, t.astype(bf), preferred_element_type=jnp.float32) + bs[i],
            0.0)
        jk = jnp.maximum(jk, h)
    logits = jnp.dot(jk.astype(bf), wfc.astype(bf),
                     preferred_element_type=jnp.float32) + bfc
    return log_softmax_ref(logits)


if __name__ == "__main__":
    # Small synthetic "dataset": N nodes, F node features, C classes.
    N, F_IN, C = 64, 32, 8

    key = jax.random.PRNGKey(0)
    k_x, k_e, k_w0, k_ws, k_wfc, k_b = jax.random.split(key, 6)

    x = jax.random.normal(k_x, (N, F_IN), jnp.float32)

    # Deterministic edge_index: a ring plus some random extra edges.
    ring_src = jnp.arange(N, dtype=jnp.int32)
    ring_dst = (ring_src + 1) % N
    extra_src = jax.random.randint(k_e, (2 * N,), 0, N, jnp.int32)
    extra_dst = jnp.roll(extra_src, 7)
    edge_index = (jnp.concatenate([ring_src, extra_src]),
                  jnp.concatenate([ring_dst, extra_dst]))
    a_hat = build_normalized_adjacency(edge_index, N)

    # Parameters (JKNet.__init__ with hidden=16, num_layers=6, mode='max').
    w0 = jax.random.normal(k_w0, (F_IN, HIDDEN), jnp.float32) * 0.2
    b0 = jnp.zeros((1, HIDDEN), jnp.float32)
    ws = jax.random.normal(k_ws, (NUM_LAYERS - 1, HIDDEN, HIDDEN),
                           jnp.float32) * 0.2
    bs = jnp.zeros((NUM_LAYERS - 1, 1, HIDDEN), jnp.float32)
    wfc = jax.random.normal(k_wfc, (HIDDEN, C), jnp.float32) * 0.2
    bfc = jax.random.normal(k_b, (1, C), jnp.float32) * 0.05

    # One-time prepare (pad + cast), reused by every forward call.
    prep = prepare_jknet_inputs(a_hat, x, w0, b0, ws, bs, wfc, bfc)

    out_auto = jax.block_until_ready(jknet_forward(prep, path="auto"))
    out_fused = jax.block_until_ready(jknet_forward(prep, path="fused"))
    out_tiled = jax.block_until_ready(jknet_forward(prep, path="tiled"))

    ref32 = jknet_ref(a_hat, x, w0, b0, ws, bs, wfc, bfc)
    refbf = jknet_ref_mixed(a_hat, x, w0, b0, ws, bs, wfc, bfc)

    assert out_auto.shape == (N, C)
    assert out_fused.shape == (N, C) and out_tiled.shape == (N, C)
    # Both kernel paths do the same mixed-precision arithmetic.
    assert jnp.allclose(out_fused, out_tiled, atol=1e-3, rtol=1e-3), \
        "fused vs tiled mismatch"
    # Match the same-precision (bf16 MXU / f32 accumulate) reference tightly.
    assert jnp.allclose(out_fused, refbf, atol=2e-3, rtol=2e-3), \
        "mismatch vs mixed-precision reference"
    assert jnp.allclose(out_tiled, refbf, atol=2e-3, rtol=2e-3), \
        "tiled mismatch vs mixed-precision reference"
    # And the full-f32 reference loosely (bf16 MXU inputs).
    assert jnp.allclose(out_fused, ref32, atol=5e-2, rtol=5e-2), \
        "mismatch vs f32 reference"
    # log_softmax rows must sum to 1 in prob space.
    assert jnp.allclose(jnp.sum(jnp.exp(out_fused), axis=1), 1.0, atol=1e-3)
    assert jnp.allclose(jnp.sum(jnp.exp(out_tiled), axis=1), 1.0, atol=1e-3)

    print("KERNEL_OK")
</pallas_src>

<mosaic_0001>
module attributes {stable_mosaic.version = 11 : i64} {
  func.func @_jknet_fused_kernel(%arg0: i32, %arg1: memref<128x128xbf16, #tpu.memory_space<any>>, %arg2: memref<128x32xbf16, #tpu.memory_space<vmem>>, %arg3: memref<32x16xbf16, #tpu.memory_space<vmem>>, %arg4: memref<5x16x16xbf16, #tpu.memory_space<vmem>>, %arg5: memref<6x1x16xf32, #tpu.memory_space<vmem>>, %arg6: memref<16x128xbf16, #tpu.memory_space<vmem>>, %arg7: memref<1x128xf32, #tpu.memory_space<vmem>>, %arg8: memref<128x128xf32, #tpu.memory_space<vmem>>, %arg9: memref<128x128xbf16, #tpu.memory_space<vmem>>, %arg10: memref<!tpu.dma_semaphore, #tpu.memory_space<semaphore_mem>>) attributes {dimension_semantics = [#tpu.dimension_semantics<arbitrary>], iteration_bounds = array<i64: 1>, scalar_prefetch = 0 : i64, scratch_operands = 2 : i64, tpu.core_type = #tpu.core_type<tc>, window_params = [{}, {pipeline_mode = #tpu.pipeline_mode<synchronous>, transform_indices = @transform_1, window_bounds = array<i64: 128, 32>}, {pipeline_mode = #tpu.pipeline_mode<synchronous>, transform_indices = @transform_2, window_bounds = array<i64: 32, 16>}, {pipeline_mode = #tpu.pipeline_mode<synchronous>, transform_indices = @transform_3, window_bounds = array<i64: 5, 16, 16>}, {pipeline_mode = #tpu.pipeline_mode<synchronous>, transform_indices = @transform_4, window_bounds = array<i64: 6, 1, 16>}, {pipeline_mode = #tpu.pipeline_mode<synchronous>, transform_indices = @transform_5, window_bounds = array<i64: 16, 128>}, {pipeline_mode = #tpu.pipeline_mode<synchronous>, transform_indices = @transform_6, window_bounds = array<i64: 1, 128>}, {pipeline_mode = #tpu.pipeline_mode<synchronous>, transform_indices = @transform_7, window_bounds = array<i64: 128, 128>}]} {
    tpu.enqueue_dma source(%arg1 : memref<128x128xbf16, #tpu.memory_space<any>>) target(%arg9 : memref<128x128xbf16, #tpu.memory_space<vmem>>) target_semaphore(%arg10 : memref<!tpu.dma_semaphore, #tpu.memory_space<semaphore_mem>>)
    %c0 = arith.constant 0 : index
    %c0_0 = arith.constant 0 : index
    %0 = vector.load %arg2[%c0, %c0_0] : memref<128x32xbf16, #tpu.memory_space<vmem>>, vector<128x32xbf16>
    %c0_1 = arith.constant 0 : index
    %c0_2 = arith.constant 0 : index
    %1 = vector.load %arg3[%c0_1, %c0_2] : memref<32x16xbf16, #tpu.memory_space<vmem>>, vector<32x16xbf16>
    %cst = arith.constant dense<0.000000e+00> : vector<128x16xf32>
    %2 = tpu.matmul %0, %1, %cst {dimension_numbers = #tpu.dot_dimension_numbers<[1], [0], [0], [1], [0, 0, 1, 1], [], []>} : vector<128x32xbf16>, vector<32x16xbf16>, vector<128x16xf32> -> vector<128x16xf32>
    tpu.wait_dma2 semaphore(%arg10 : memref<!tpu.dma_semaphore, #tpu.memory_space<semaphore_mem>>) src(%arg1 : memref<128x128xbf16, #tpu.memory_space<any>>) dst(%arg9 : memref<128x128xbf16, #tpu.memory_space<vmem>>)
    %c0_3 = arith.constant 0 : index
    %c0_4 = arith.constant 0 : index
    %3 = vector.load %arg9[%c0_3, %c0_4] : memref<128x128xbf16, #tpu.memory_space<vmem>>, vector<128x128xbf16>
    %4 = arith.truncf %2 : vector<128x16xf32> to vector<128x16xbf16>
    %cst_5 = arith.constant dense<0.000000e+00> : vector<128x16xf32>
    %5 = tpu.matmul %3, %4, %cst_5 {dimension_numbers = #tpu.dot_dimension_numbers<[1], [0], [0], [1], [0, 0, 1, 1], [], []>} : vector<128x128xbf16>, vector<128x16xbf16>, vector<128x16xf32> -> vector<128x16xf32>
    %c0_6 = arith.constant 0 : index
    %c0_7 = arith.constant 0 : index
    %c0_8 = arith.constant 0 : index
    %6 = vector.load %arg5[%c0_6, %c0_7, %c0_8] : memref<6x1x16xf32, #tpu.memory_space<vmem>>, vector<1x1x16xf32>
    %7 = vector.shape_cast %6 : vector<1x1x16xf32> to vector<1x16xf32>
    %8 = vector.broadcast %7 : vector<1x16xf32> to vector<128x16xf32>
    %9 = arith.addf %5, %8 : vector<128x16xf32>
    %cst_9 = arith.constant 0.000000e+00 : f32
    %10 = vector.broadcast %cst_9 : f32 to vector<128x16xf32>
    %11 = arith.maximumf %9, %10 : vector<128x16xf32>
    %12 = arith.truncf %11 : vector<128x16xf32> to vector<128x16xbf16>
    %c0_10 = arith.constant 0 : index
    %c0_11 = arith.constant 0 : index
    %c0_12 = arith.constant 0 : index
    %13 = vector.load %arg4[%c0_10, %c0_11, %c0_12] : memref<5x16x16xbf16, #tpu.memory_space<vmem>>, vector<1x16x16xbf16>
    %14 = vector.shape_cast %13 : vector<1x16x16xbf16> to vector<16x16xbf16>
    %cst_13 = arith.constant dense<0.000000e+00> : vector<128x16xf32>
    %15 = tpu.matmul %12, %14, %cst_13 {dimension_numbers = #tpu.dot_dimension_numbers<[1], [0], [0], [1], [0, 0, 1, 1], [], []>} : vector<128x16xbf16>, vector<16x16xbf16>, vector<128x16xf32> -> vector<128x16xf32>
    %16 = arith.truncf %15 : vector<128x16xf32> to vector<128x16xbf16>
    %cst_14 = arith.constant dense<0.000000e+00> : vector<128x16xf32>
    %17 = tpu.matmul %3, %16, %cst_14 {dimension_numbers = #tpu.dot_dimension_numbers<[1], [0], [0], [1], [0, 0, 1, 1], [], []>} : vector<128x128xbf16>, vector<128x16xbf16>, vector<128x16xf32> -> vector<128x16xf32>
    %c1 = arith.constant 1 : index
    %c0_15 = arith.constant 0 : index
    %c0_16 = arith.constant 0 : index
    %18 = vector.load %arg5[%c1, %c0_15, %c0_16] : memref<6x1x16xf32, #tpu.memory_space<vmem>>, vector<1x1x16xf32>
    %19 = vector.shape_cast %18 : vector<1x1x16xf32> to vector<1x16xf32>
    %20 = vector.broadcast %19 : vector<1x16xf32> to vector<128x16xf32>
    %21 = arith.addf %17, %20 : vector<128x16xf32>
    %cst_17 = arith.constant 0.000000e+00 : f32
    %22 = vector.broadcast %cst_17 : f32 to vector<128x16xf32>
    %23 = arith.maximumf %21, %22 : vector<128x16xf32>
    %24 = arith.maximumf %11, %23 : vector<128x16xf32>
    %25 = arith.truncf %23 : vector<128x16xf32> to vector<128x16xbf16>
    %c1_18 = arith.constant 1 : index
    %c0_19 = arith.constant 0 : index
    %c0_20 = arith.constant 0 : index
    %26 = vector.load %arg4[%c1_18, %c0_19, %c0_20] : memref<5x16x16xbf16, #tpu.memory_space<vmem>>, vector<1x16x16xbf16>
    %27 = vector.shape_cast %26 : vector<1x16x16xbf16> to vector<16x16xbf16>
    %cst_21 = arith.constant dense<0.000000e+00> : vector<128x16xf32>
    %28 = tpu.matmul %25, %27, %cst_21 {dimension_numbers = #tpu.dot_dimension_numbers<[1], [0], [0], [1], [0, 0, 1, 1], [], []>} : vector<128x16xbf16>, vector<16x16xbf16>, vector<128x16xf32> -> vector<128x16xf32>
    %29 = arith.truncf %28 : vector<128x16xf32> to vector<128x16xbf16>
    %cst_22 = arith.constant dense<0.000000e+00> : vector<128x16xf32>
    %30 = tpu.matmul %3, %29, %cst_22 {dimension_numbers = #tpu.dot_dimension_numbers<[1], [0], [0], [1], [0, 0, 1, 1], [], []>} : vector<128x128xbf16>, vector<128x16xbf16>, vector<128x16xf32> -> vector<128x16xf32>
    %c2 = arith.constant 2 : index
    %c0_23 = arith.constant 0 : index
    %c0_24 = arith.constant 0 : index
    %31 = vector.load %arg5[%c2, %c0_23, %c0_24] : memref<6x1x16xf32, #tpu.memory_space<vmem>>, vector<1x1x16xf32>
    %32 = vector.shape_cast %31 : vector<1x1x16xf32> to vector<1x16xf32>
    %33 = vector.broadcast %32 : vector<1x16xf32> to vector<128x16xf32>
    %34 = arith.addf %30, %33 : vector<128x16xf32>
    %cst_25 = arith.constant 0.000000e+00 : f32
    %35 = vector.broadcast %cst_25 : f32 to vector<128x16xf32>
    %36 = arith.maximumf %34, %35 : vector<128x16xf32>
    %37 = arith.maximumf %24, %36 : vector<128x16xf32>
    %38 = arith.truncf %36 : vector<128x16xf32> to vector<128x16xbf16>
    %c2_26 = arith.constant 2 : index
    %c0_27 = arith.constant 0 : index
    %c0_28 = arith.constant 0 : index
    %39 = vector.load %arg4[%c2_26, %c0_27, %c0_28] : memref<5x16x16xbf16, #tpu.memory_space<vmem>>, vector<1x16x16xbf16>
    %40 = vector.shape_cast %39 : vector<1x16x16xbf16> to vector<16x16xbf16>
    %cst_29 = arith.constant dense<0.000000e+00> : vector<128x16xf32>
    %41 = tpu.matmul %38, %40, %cst_29 {dimension_numbers = #tpu.dot_dimension_numbers<[1], [0], [0], [1], [0, 0, 1, 1], [], []>} : vector<128x16xbf16>, vector<16x16xbf16>, vector<128x16xf32> -> vector<128x16xf32>
    %42 = arith.truncf %41 : vector<128x16xf32> to vector<128x16xbf16>
    %cst_30 = arith.constant dense<0.000000e+00> : vector<128x16xf32>
    %43 = tpu.matmul %3, %42, %cst_30 {dimension_numbers = #tpu.dot_dimension_numbers<[1], [0], [0], [1], [0, 0, 1, 1], [], []>} : vector<128x128xbf16>, vector<128x16xbf16>, vector<128x16xf32> -> vector<128x16xf32>
    %c3 = arith.constant 3 : index
    %c0_31 = arith.constant 0 : index
    %c0_32 = arith.constant 0 : index
    %44 = vector.load %arg5[%c3, %c0_31, %c0_32] : memref<6x1x16xf32, #tpu.memory_space<vmem>>, vector<1x1x16xf32>
    %45 = vector.shape_cast %44 : vector<1x1x16xf32> to vector<1x16xf32>
    %46 = vector.broadcast %45 : vector<1x16xf32> to vector<128x16xf32>
    %47 = arith.addf %43, %46 : vector<128x16xf32>
    %cst_33 = arith.constant 0.000000e+00 : f32
    %48 = vector.broadcast %cst_33 : f32 to vector<128x16xf32>
    %49 = arith.maximumf %47, %48 : vector<128x16xf32>
    %50 = arith.maximumf %37, %49 : vector<128x16xf32>
    %51 = arith.truncf %49 : vector<128x16xf32> to vector<128x16xbf16>
    %c3_34 = arith.constant 3 : index
    %c0_35 = arith.constant 0 : index
    %c0_36 = arith.constant 0 : index
    %52 = vector.load %arg4[%c3_34, %c0_35, %c0_36] : memref<5x16x16xbf16, #tpu.memory_space<vmem>>, vector<1x16x16xbf16>
    %53 = vector.shape_cast %52 : vector<1x16x16xbf16> to vector<16x16xbf16>
    %cst_37 = arith.constant dense<0.000000e+00> : vector<128x16xf32>
    %54 = tpu.matmul %51, %53, %cst_37 {dimension_numbers = #tpu.dot_dimension_numbers<[1], [0], [0], [1], [0, 0, 1, 1], [], []>} : vector<128x16xbf16>, vector<16x16xbf16>, vector<128x16xf32> -> vector<128x16xf32>
    %55 = arith.truncf %54 : vector<128x16xf32> to vector<128x16xbf16>
    %cst_38 = arith.constant dense<0.000000e+00> : vector<128x16xf32>
    %56 = tpu.matmul %3, %55, %cst_38 {dimension_numbers = #tpu.dot_dimension_numbers<[1], [0], [0], [1], [0, 0, 1, 1], [], []>} : vector<128x128xbf16>, vector<128x16xbf16>, vector<128x16xf32> -> vector<128x16xf32>
    %c4 = arith.constant 4 : index
    %c0_39 = arith.constant 0 : index
    %c0_40 = arith.constant 0 : index
    %57 = vector.load %arg5[%c4, %c0_39, %c0_40] : memref<6x1x16xf32, #tpu.memory_space<vmem>>, vector<1x1x16xf32>
    %58 = vector.shape_cast %57 : vector<1x1x16xf32> to vector<1x16xf32>
    %59 = vector.broadcast %58 : vector<1x16xf32> to vector<128x16xf32>
    %60 = arith.addf %56, %59 : vector<128x16xf32>
    %cst_41 = arith.constant 0.000000e+00 : f32
    %61 = vector.broadcast %cst_41 : f32 to vector<128x16xf32>
    %62 = arith.maximumf %60, %61 : vector<128x16xf32>
    %63 = arith.maximumf %50, %62 : vector<128x16xf32>
    %64 = arith.truncf %62 : vector<128x16xf32> to vector<128x16xbf16>
    %c4_42 = arith.constant 4 : index
    %c0_43 = arith.constant 0 : index
    %c0_44 = arith.constant 0 : index
    %65 = vector.load %arg4[%c4_42, %c0_43, %c0_44] : memref<5x16x16xbf16, #tpu.memory_space<vmem>>, vector<1x16x16xbf16>
    %66 = vector.shape_cast %65 : vector<1x16x16xbf16> to vector<16x16xbf16>
    %cst_45 = arith.constant dense<0.000000e+00> : vector<128x16xf32>
    %67 = tpu.matmul %64, %66, %cst_45 {dimension_numbers = #tpu.dot_dimension_numbers<[1], [0], [0], [1], [0, 0, 1, 1], [], []>} : vector<128x16xbf16>, vector<16x16xbf16>, vector<128x16xf32> -> vector<128x16xf32>
    %68 = arith.truncf %67 : vector<128x16xf32> to vector<128x16xbf16>
    %cst_46 = arith.constant dense<0.000000e+00> : vector<128x16xf32>
    %69 = tpu.matmul %3, %68, %cst_46 {dimension_numbers = #tpu.dot_dimension_numbers<[1], [0], [0], [1], [0, 0, 1, 1], [], []>} : vector<128x128xbf16>, vector<128x16xbf16>, vector<128x16xf32> -> vector<128x16xf32>
    %c5 = arith.constant 5 : index
    %c0_47 = arith.constant 0 : index
    %c0_48 = arith.constant 0 : index
    %70 = vector.load %arg5[%c5, %c0_47, %c0_48] : memref<6x1x16xf32, #tpu.memory_space<vmem>>, vector<1x1x16xf32>
    %71 = vector.shape_cast %70 : vector<1x1x16xf32> to vector<1x16xf32>
    %72 = vector.broadcast %71 : vector<1x16xf32> to vector<128x16xf32>
    %73 = arith.addf %69, %72 : vector<128x16xf32>
    %cst_49 = arith.constant 0.000000e+00 : f32
    %74 = vector.broadcast %cst_49 : f32 to vector<128x16xf32>
    %75 = arith.maximumf %73, %74 : vector<128x16xf32>
    %76 = arith.maximumf %63, %75 : vector<128x16xf32>
    %77 = arith.truncf %76 : vector<128x16xf32> to vector<128x16xbf16>
    %c0_50 = arith.constant 0 : index
    %c0_51 = arith.constant 0 : index
    %78 = vector.load %arg6[%c0_50, %c0_51] : memref<16x128xbf16, #tpu.memory_space<vmem>>, vector<16x128xbf16>
    %cst_52 = arith.constant dense<0.000000e+00> : vector<128x128xf32>
    %79 = tpu.matmul %77, %78, %cst_52 {dimension_numbers = #tpu.dot_dimension_numbers<[1], [0], [0], [1], [0, 0, 1, 1], [], []>} : vector<128x16xbf16>, vector<16x128xbf16>, vector<128x128xf32> -> vector<128x128xf32>
    %c0_53 = arith.constant 0 : index
    %c0_54 = arith.constant 0 : index
    %80 = vector.load %arg7[%c0_53, %c0_54] : memref<1x128xf32, #tpu.memory_space<vmem>>, vector<1x128xf32>
    %81 = vector.broadcast %80 : vector<1x128xf32> to vector<128x128xf32>
    %82 = arith.addf %79, %81 : vector<128x128xf32>
    %cst_55 = arith.constant dense<0xFF800000> : vector<128xf32>
    %83 = vector.multi_reduction <maximumf>, %82, %cst_55 [1] : vector<128x128xf32> to vector<128xf32>
    %84 = vector.shape_cast %83 : vector<128xf32> to vector<128x1xf32>
    %85 = vector.broadcast %84 : vector<128x1xf32> to vector<128x128xf32>
    %86 = arith.subf %82, %85 : vector<128x128xf32>
    %87 = math.exp %86 : vector<128x128xf32>
    %cst_56 = arith.constant dense<0.000000e+00> : vector<128xf32>
    %88 = vector.multi_reduction <add>, %87, %cst_56 [1] : vector<128x128xf32> to vector<128xf32>
    %89 = vector.shape_cast %88 : vector<128xf32> to vector<128x1xf32>
    %90 = math.log %89 : vector<128x1xf32>
    %91 = arith.addf %84, %90 : vector<128x1xf32>
    %92 = vector.broadcast %91 : vector<128x1xf32> to vector<128x128xf32>
    %93 = arith.subf %82, %92 : vector<128x128xf32>
    %c0_57 = arith.constant 0 : index
    %c0_58 = arith.constant 0 : index
    %94 = vector.load %arg8[%c0_57, %c0_58] : memref<128x128xf32, #tpu.memory_space<vmem>>, vector<128x128xf32>
    tpu.vector_store %arg8[%c0_57, %c0_58], %93 {strides = array<i32>} : memref<128x128xf32, #tpu.memory_space<vmem>>, vector<128x128xf32>,
    return
  }
  func.func @transform_1(%arg0: i32) -> (i32, i32) {
    %c0_i32 = arith.constant 0 : i32
    %c0_i32_0 = arith.constant 0 : i32
    %c0_i32_1 = arith.constant 0 : i32
    return %c0_i32, %c0_i32_0 : i32, i32
  }
  func.func @transform_2(%arg0: i32) -> (i32, i32) {
    %c0_i32 = arith.constant 0 : i32
    %c0_i32_0 = arith.constant 0 : i32
    %c0_i32_1 = arith.constant 0 : i32
    return %c0_i32, %c0_i32_0 : i32, i32
  }
  func.func @transform_3(%arg0: i32) -> (i32, i32, i32) {
    %c0_i32 = arith.constant 0 : i32
    %c0_i32_0 = arith.constant 0 : i32
    %c0_i32_1 = arith.constant 0 : i32
    %c0_i32_2 = arith.constant 0 : i32
    return %c0_i32, %c0_i32_0, %c0_i32_1 : i32, i32, i32
  }
  func.func @transform_4(%arg0: i32) -> (i32, i32, i32) {
    %c0_i32 = arith.constant 0 : i32
    %c0_i32_0 = arith.constant 0 : i32
    %c0_i32_1 = arith.constant 0 : i32
    %c0_i32_2 = arith.constant 0 : i32
    return %c0_i32, %c0_i32_0, %c0_i32_1 : i32, i32, i32
  }
  func.func @transform_5(%arg0: i32) -> (i32, i32) {
    %c0_i32 = arith.constant 0 : i32
    %c0_i32_0 = arith.constant 0 : i32
    %c0_i32_1 = arith.constant 0 : i32
    return %c0_i32, %c0_i32_0 : i32, i32
  }
  func.func @transform_6(%arg0: i32) -> (i32, i32) {
    %c0_i32 = arith.constant 0 : i32
    %c0_i32_0 = arith.constant 0 : i32
    %c0_i32_1 = arith.constant 0 : i32
    return %c0_i32, %c0_i32_0 : i32, i32
  }
  func.func @transform_7(%arg0: i32) -> (i32, i32) {
    %c0_i32 = arith.constant 0 : i32
    %c0_i32_0 = arith.constant 0 : i32
    %c0_i32_1 = arith.constant 0 : i32
    return %c0_i32, %c0_i32_0 : i32, i32
  }
}

</mosaic_0001>

<llo_original>
// kernel: _fused_forward.1
$region0: #{_fused_forward.1}
  #allocation0 [shape = 'u32[]', space=smem, size = 0x4, offset = 0x4, fixed_abs, tag = 'smem constant byte address 0x4 - core index']
  #allocation1 [shape = 'u32[144,128]{1,0:T(1,128)}', space=vmem, size = 0x12000, scoped, tag = 'internal scratch']
  #allocation2 [shape = 'bf16[128,128]{1,0:T(8,128)(2,1)}', space=vmem, size = 0x8000, scoped, tag = 'scratch operand']
  #allocation3 [shape = 's32[1]{0}', space=sflag, size = 0x4, scoped, tag = 'scratch operand']
  #allocation8 [shape = 's32[]', space=sflag, size = 0x4, offset = 0, fixed_abs, tag = 'sflag constant byte address 0x0 - dummy sync flag']
  %s0 = inlined_call_operand.vmem [shape: bf16[128,128], index: 0, kind: input, shape index: {}]
  %s1 = inlined_call_operand.vmem [shape: bf16[128,32], index: 1, kind: input, shape index: {}]
  %s2 = inlined_call_operand.vmem [shape: bf16[32,16], index: 2, kind: input, shape index: {}]
  %s3 = inlined_call_operand.vmem [shape: bf16[5,16,16], index: 3, kind: input, shape index: {}]
  %s4 = inlined_call_operand.hbm [shape: f32[6,1,16], index: 4, kind: input, shape index: {}]
  %s5 = inlined_call_operand.vmem [shape: bf16[16,128], index: 5, kind: input, shape index: {}]
  %s6 = inlined_call_operand.vmem [shape: f32[1,128], index: 6, kind: input, shape index: {}]
  %s7 = inlined_call_operand.hbm [shape: f32[128,128], index: 7, kind: output, shape index: {}]
  %s8 = sld [smem:[#allocation0]]
  $region72: #{_fused_forward.1} parent=0
    _
  %s10 = ssub.s32 1, %s8
  %s11 = scalar_select 0, %s10, %s8
  $region1: #{_fused_forward.1} parent=0
    #allocation4 [shape = 'u8[3072]{0}', space=vmem, size = 0xc00, scoped, tag = 'input window, operand 4, single buffered']
    #allocation5 [shape = 's32[1]{0}', space=sflag, size = 0x4, scoped, tag = 'scoped memory for _fused_forward.1']
    #allocation6 [shape = 's32[1]{0}', space=sflag, size = 0x4, scoped, tag = 'scoped memory for _fused_forward.1']
    #allocation7 [shape = 'u8[65536]{0}', space=vmem, size = 0x10000, scoped, tag = 'output window, operand 0, single buffered']
    %12 = vsyncpa [#allocation5], 0
    %13 = vsyncpa [#allocation6], 0
    // Predicated region
    $region2: #{_fused_forward.1} parent=1 // pred_check
      _
    $region3: #{_fused_forward.1} parent=1 // pred_check_branch
      %15 = sbr.rel (0) target = $region5
    $region4: #{_fused_forward.1} parent=1 // pred_region
      _
    $region5: #{_fused_forward.1} parent=1 // pred_fallthru
      _
    // Predicated region
    $region6: #{_fused_forward.1} parent=1 // pred_check
      _
    $region7: #{_fused_forward.1} parent=1 // pred_check_branch
      %17 = sbr.rel (0) target = $region9
    $region8: #{_fused_forward.1} parent=1 // pred_region
      _
    $region9: #{_fused_forward.1} parent=1 // pred_fallthru
      _
    // Predicated region
    $region10: #{_fused_forward.1} parent=1 // pred_check
      _
    $region11: #{_fused_forward.1} parent=1 // pred_check_branch
      %19 = sbr.rel (0) target = $region13
    $region12: #{_fused_forward.1} parent=1 // pred_region
      _
    $region13: #{_fused_forward.1} parent=1 // pred_fallthru
      _
    // Predicated region
    $region14: #{_fused_forward.1} parent=1 // pred_check
      _
    $region15: #{_fused_forward.1} parent=1 // pred_check_branch
      %21 = sbr.rel (0) target = $region17
    $region16: #{_fused_forward.1} parent=1 // pred_region
      %s23 = ssub.s32 96, 96
      %24 = vsyncadd [#allocation5], %s23
      %s25 = sshll.u32 [#allocation4], 4
      %s26 = int_to_ptr.vmem [resolvable:$true] %s25
      %31 = dma.hbm_to_vmem [thread:$0]  %s4, 96, %s26, [#allocation5], 16, 16, 1
    $region17: #{_fused_forward.1} parent=1 // pred_fallthru
      _
    // Predicated region
    $region18: #{_fused_forward.1} parent=1 // pred_check
      _
    $region19: #{_fused_forward.1} parent=1 // pred_check_branch
      %33 = sbr.rel (0) target = $region21
    $region20: #{_fused_forward.1} parent=1 // pred_region
      _
    $region21: #{_fused_forward.1} parent=1 // pred_fallthru
      _
    // Predicated region
    $region22: #{_fused_forward.1} parent=1 // pred_check
      _
    $region23: #{_fused_forward.1} parent=1 // pred_check_branch
      %35 = sbr.rel (0) target = $region25
    $region24: #{_fused_forward.1} parent=1 // pred_region
      _
    $region25: #{_fused_forward.1} parent=1 // pred_fallthru
      _
    // Predicated region
    $region26: #{_fused_forward.1} parent=1 // pred_check
      _
    $region27: #{_fused_forward.1} parent=1 // pred_check_branch
      %37 = sbr.rel (0) target = $region29
    $region28: #{_fused_forward.1} parent=1 // pred_region
      %38 = dma.done [#allocation5], 96
    $region29: #{_fused_forward.1} parent=1 // pred_fallthru
      _
    %p41 = scmp.lt.u32.totalorder 64, 8
    %p42 = pneg %p41
    // Predicated region
    $region30: #{_fused_forward.1} parent=1 // pred_check
      _
    $region31: #{_fused_forward.1} parent=1 // pred_check_branch
      %44 = sbr.rel (%p41) target = $region33
    $region32: #{_fused_forward.1} parent=1 // pred_region
      %s60 = sand.u32 64, 7
      %p61 = scmp.eq.s32.totalorder %s60, 0
      // Predicated region
      $region45: #{_fused_forward.1} parent=32 // pred_check
        %p62 = pneg %p61
      $region46: #{_fused_forward.1} parent=32 // pred_check_branch
        %64 = sbr.rel (%p62) target = $region48
      $region47: #{_fused_forward.1} parent=32 // pred_region
        loop: start=0, step=1, limit=1
        $region49: #{_fused_forward.1} parent=47 // loop_pre_header
          _
        $region50: #{_fused_forward.1} parent=47 // loop_header
          %s66 = sphi 0, %s70
          %p67 = scmp.ge.s32.totalorder %s66, 1
          %s71 = sphi %s0, %s0
          %s72 = sphi [#allocation2], [#allocation2]
        $region51: #{_fused_forward.1} parent=47 // loop_header_branch
          %69 = sbr.rel (%p67) target = $region55
        $region52: #{_fused_forward.1} parent=47 // loop_body
          %v73 = vld [vmem:[%s71] sm:$0xff]
          %74 = vst [vmem:[%s72] sm:$0xff] %v73
          %v75 = vld [vmem:[%s71 + $0x8] sm:$0xff]
          %76 = vst [vmem:[%s72 + $0x8] sm:$0xff] %v75
          %v77 = vld [vmem:[%s71 + $0x10] sm:$0xff]
          %78 = vst [vmem:[%s72 + $0x10] sm:$0xff] %v77
          %v79 = vld [vmem:[%s71 + $0x18] sm:$0xff]
          %80 = vst [vmem:[%s72 + $0x18] sm:$0xff] %v79
          %v81 = vld [vmem:[%s71 + $0x20] sm:$0xff]
          %82 = vst [vmem:[%s72 + $0x20] sm:$0xff] %v81
          %v83 = vld [vmem:[%s71 + $0x28] sm:$0xff]
          %84 = vst [vmem:[%s72 + $0x28] sm:$0xff] %v83
          %v85 = vld [vmem:[%s71 + $0x30] sm:$0xff]
          %86 = vst [vmem:[%s72 + $0x30] sm:$0xff] %v85
          %v87 = vld [vmem:[%s71 + $0x38] sm:$0xff]
          %88 = vst [vmem:[%s72 + $0x38] sm:$0xff] %v87
        $region53: #{_fused_forward.1} parent=47 // loop_footer
          %s70 = sadd.s32 1, %s66
        $region54: #{_fused_forward.1} parent=47 // loop_footer_branch
          %65 = sbr.rel target = $region50
        $region55: #{_fused_forward.1} parent=47 // loop_exit
          _
      $region48: #{_fused_forward.1} parent=32 // pred_fallthru
        _
      %p89 = pneg %p61
      // Predicated region
      $region56: #{_fused_forward.1} parent=32 // pred_check
        _
      $region57: #{_fused_forward.1} parent=32 // pred_check_branch
        %91 = sbr.rel (%p61) target = $region59
      $region58: #{_fused_forward.1} parent=32 // pred_region
        %s92 = sand.u32 64, 7
      $region59: #{_fused_forward.1} parent=32 // pred_fallthru
        _
    $region33: #{_fused_forward.1} parent=1 // pred_fallthru
      _
    // Predicated region
    $region34: #{_fused_forward.1} parent=1 // pred_check
      %p45 = pneg %p41
    $region35: #{_fused_forward.1} parent=1 // pred_check_branch
      %47 = sbr.rel (%p45) target = $region37
    $region36: #{_fused_forward.1} parent=1 // pred_region
      %s48 = sshll.u32 1, 64
      %s49 = ssub.s32 %s48, 1
      loop: start=0, step=1, limit=1
      $region38: #{_fused_forward.1} parent=36 // loop_pre_header
        _
      $region39: #{_fused_forward.1} parent=36 // loop_header
        %s51 = sphi 0, %s55
        %p52 = scmp.ge.s32.totalorder %s51, 1
        %s56 = sphi %s0, %s0
        %s57 = sphi [#allocation2], [#allocation2]
      $region40: #{_fused_forward.1} parent=36 // loop_header_branch
        %54 = sbr.rel (%p52) target = $region44
      $region41: #{_fused_forward.1} parent=36 // loop_body
        %v58 = vld [vmem:[%s56] sm:%s49]
        %59 = vst [vmem:[%s57] sm:%s49] %v58
      $region42: #{_fused_forward.1} parent=36 // loop_footer
        %s55 = sadd.s32 1, %s51
      $region43: #{_fused_forward.1} parent=36 // loop_footer_branch
        %50 = sbr.rel target = $region39
      $region44: #{_fused_forward.1} parent=36 // loop_exit
        _
    $region37: #{_fused_forward.1} parent=1 // pred_fallthru
      _
    // Predicated region
    $region60: #{_fused_forward.1} parent=1 // pred_check
      _
    $region61: #{_fused_forward.1} parent=1 // pred_check_branch
      %95 = sbr.rel (0) target = $region63
    $region62: #{_fused_forward.1} parent=1 // pred_region
      %96 = vsyncadd [#allocation3], 1024
    $region63: #{_fused_forward.1} parent=1 // pred_fallthru
      _
    %v97 = vld [vmem:[%s1] sm:$0xf]
    %v98 = vld [vmem:[%s1 + $0x4] sm:$0xf]
    %v99 = vld [vmem:[%s1 + $0x8] sm:$0xf]
    %v100 = vld [vmem:[%s1 + $0xc] sm:$0xf]
    %v101 = vld [vmem:[%s1 + $0x10] sm:$0xf]
    %v102 = vld [vmem:[%s1 + $0x14] sm:$0xf]
    %v103 = vld [vmem:[%s1 + $0x18] sm:$0xf]
    %v104 = vld [vmem:[%s1 + $0x1c] sm:$0xf]
    %v105 = vld [vmem:[%s1 + $0x20] sm:$0xf]
    %v106 = vld [vmem:[%s1 + $0x24] sm:$0xf]
    %v107 = vld [vmem:[%s1 + $0x28] sm:$0xf]
    %v108 = vld [vmem:[%s1 + $0x2c] sm:$0xf]
    %v109 = vld [vmem:[%s1 + $0x30] sm:$0xf]
    %v110 = vld [vmem:[%s1 + $0x34] sm:$0xf]
    %v111 = vld [vmem:[%s1 + $0x38] sm:$0xf]
    %v112 = vld [vmem:[%s1 + $0x3c] sm:$0xf]
    %v113 = vld [vmem:[%s2] sm:$0xf]
    %v114 = vld [vmem:[%s2 + $0x4] sm:$0xf]
    %v115 = vld [vmem:[%s2 + $0x8] sm:$0xf]
    %v116 = vld [vmem:[%s2 + $0xc] sm:$0xf]
    %v133 = vunpack.c.l.b16 %v97
    %v134 = vunpack.c.l.b16 %v98
    %v135 = vunpack.c.l.b16 %v99
    %v136 = vunpack.c.l.b16 %v100
    %v137 = vunpack.c.l.b16 %v101
    %v138 = vunpack.c.l.b16 %v102
    %v139 = vunpack.c.l.b16 %v103
    %v140 = vunpack.c.l.b16 %v104
    %v141 = vunpack.c.l.b16 %v105
    %v142 = vunpack.c.l.b16 %v106
    %v143 = vunpack.c.l.b16 %v107
    %v144 = vunpack.c.l.b16 %v108
    %v145 = vunpack.c.l.b16 %v109
    %v146 = vunpack.c.l.b16 %v110
    %v147 = vunpack.c.l.b16 %v111
    %v148 = vunpack.c.l.b16 %v112
    %v149 = vpack.c.b16 %v134, %v133
    %v150 = vpack.c.b16 %v136, %v135
    %v151 = vpack.c.b16 %v138, %v137
    %v152 = vpack.c.b16 %v140, %v139
    %v153 = vpack.c.b16 %v142, %v141
    %v154 = vpack.c.b16 %v144, %v143
    %v155 = vpack.c.b16 %v146, %v145
    %v156 = vpack.c.b16 %v148, %v147
    %v161 = vunpack.c.l.b16 %v113
    %v162 = vunpack.c.l.b16 %v114
    %v163 = vunpack.c.l.b16 %v115
    %v164 = vunpack.c.l.b16 %v116
    %v165 = vpack.c.b16 %v162, %v161
    %v166 = vpack.c.b16 %v164, %v163
    %vm169 = vcmask 261120
    %v171 = vsel %vm169, %v149, 0
    %v174 = vsel %vm169, %v150, 0
    %v177 = vsel %vm169, %v151, 0
    %v180 = vsel %vm169, %v152, 0
    %v183 = vsel %vm169, %v153, 0
    %v186 = vsel %vm169, %v154, 0
    %v189 = vsel %vm169, %v155, 0
    %v192 = vsel %vm169, %v156, 0
    %194 = vmatprep.subr.bf16.mxu0 0
    %195 = vmatpush1.bf16.msra.mxu0 0
    %196 = vmatprep.subr.bf16.mxu0 0
    %197 = vmatpush1.bf16.msra.mxu0 0
    %198 = vmatprep.subr.bf16.mxu0 0
    %199 = vmatpush1.bf16.msra.mxu0 0
    %200 = vmatprep.subr.bf16.mxu0 0
    %201 = vmatpush1.bf16.msra.mxu0 0
    %202 = vmatprep.subr.bf16.mxu0 0
    %203 = vmatpush1.bf16.msra.mxu0 0
    %204 = vmatprep.subr.bf16.mxu0 0
    %205 = vmatpush1.bf16.msra.mxu0 0
    %206 = vmatprep.subr.bf16.mxu0 0
    %207 = vmatpush1.bf16.msra.mxu0 %v166
    %208 = vmatprep.subr.bf16.mxu0 0
    %209 = vmatpush1.bf16.msra.mxu0 %v165
    %210 = vmatprep.subr.bf16.mxu0 0
    %211 = vmatpush2.bf16.msra.mxu0 0
    %212 = vmatprep.subr.bf16.mxu0 0
    %213 = vmatpush2.bf16.msra.mxu0 0
    %214 = vmatprep.subr.bf16.mxu0 0
    %215 = vmatpush2.bf16.msra.mxu0 0
    %216 = vmatprep.subr.bf16.mxu0 0
    %217 = vmatpush2.bf16.msra.mxu0 0
    %218 = vmatprep.subr.bf16.mxu0 0
    %219 = vmatpush2.bf16.msra.mxu0 0
    %220 = vmatprep.subr.bf16.mxu0 0
    %221 = vmatpush2.bf16.msra.mxu0 0
    %222 = vmatprep.subr.bf16.mxu0 0
    %223 = vmatpush2.bf16.msra.mxu0 0
    %224 = vmatprep.subr.bf16.mxu0 0
    %225 = vmatpush2.bf16.msra.mxu0 0
    %226 = vmatprep.mubr.bf16.mxu0 0
    %227 = vmatmul.mubr.bf16.gmra.mxu0 %v171
    %v228 = vpop.f32.mrf.mxu0
    %v229 = vadd.f32 0.0, %v228
    %v230 = vpop.f32.mrf.mxu0
    %v231 = vpop.f32.mrf.mxu0
    %v232 = vadd.f32 0.0, %v231
    %v233 = vpop.f32.mrf.mxu0
    %234 = vmatprep.mubr.bf16.mxu0 0
    %235 = vmatmul.mubr.bf16.gmra.mxu0 %v174
    %v236 = vpop.f32.mrf.mxu0
    %v237 = vadd.f32 0.0, %v236
    %v238 = vpop.f32.mrf.mxu0
    %v239 = vpop.f32.mrf.mxu0
    %v240 = vadd.f32 0.0, %v239
    %v241 = vpop.f32.mrf.mxu0
    %242 = vmatprep.mubr.bf16.mxu0 0
    %243 = vmatmul.mubr.bf16.gmra.mxu0 %v177
    %v244 = vpop.f32.mrf.mxu0
    %v245 = vadd.f32 0.0, %v244
    %v246 = vpop.f32.mrf.mxu0
    %v247 = vpop.f32.mrf.mxu0
    %v248 = vadd.f32 0.0, %v247
    %v249 = vpop.f32.mrf.mxu0
    %250 = vmatprep.mubr.bf16.mxu0 0
    %251 = vmatmul.mubr.bf16.gmra.mxu0 %v180
    %v252 = vpop.f32.mrf.mxu0
    %v253 = vadd.f32 0.0, %v252
    %v254 = vpop.f32.mrf.mxu0
    %v255 = vpop.f32.mrf.mxu0
    %v256 = vadd.f32 0.0, %v255
    %v257 = vpop.f32.mrf.mxu0
    %258 = vmatprep.mubr.bf16.mxu0 0
    %259 = vmatmul.mubr.bf16.gmra.mxu0 %v183
    %v260 = vpop.f32.mrf.mxu0
    %v261 = vadd.f32 0.0, %v260
    %v262 = vpop.f32.mrf.mxu0
    %v263 = vpop.f32.mrf.mxu0
    %v264 = vadd.f32 0.0, %v263
    %v265 = vpop.f32.mrf.mxu0
    %266 = vmatprep.mubr.bf16.mxu0 0
    %267 = vmatmul.mubr.bf16.gmra.mxu0 %v186
    %v268 = vpop.f32.mrf.mxu0
    %v269 = vadd.f32 0.0, %v268
    %v270 = vpop.f32.mrf.mxu0
    %v271 = vpop.f32.mrf.mxu0
    %v272 = vadd.f32 0.0, %v271
    %v273 = vpop.f32.mrf.mxu0
    %274 = vmatprep.mubr.bf16.mxu0 0
    %275 = vmatmul.mubr.bf16.gmra.mxu0 %v189
    %v276 = vpop.f32.mrf.mxu0
    %v277 = vadd.f32 0.0, %v276
    %v278 = vpop.f32.mrf.mxu0
    %v279 = vpop.f32.mrf.mxu0
    %v280 = vadd.f32 0.0, %v279
    %v281 = vpop.f32.mrf.mxu0
    %282 = vmatprep.mubr.bf16.mxu0 0
    %283 = vmatmul.mubr.bf16.gmra.mxu0 %v192
    %v284 = vpop.f32.mrf.mxu0
    %v285 = vadd.f32 0.0, %v284
    %v286 = vpop.f32.mrf.mxu0
    %v287 = vpop.f32.mrf.mxu0
    %v288 = vadd.f32 0.0, %v287
    %v289 = vpop.f32.mrf.mxu0
    %290 = vdwg.mxu0
    %s291 = smul.u32 4, 16
    %s292 = smul.u32 %s291, 1
    %s293 = sshll.u32 %s292, 4
    %294 = dma.done [#allocation3], %s293
    %v295 = vld [vmem:[#allocation2] sm:$0xf]
    %v296 = vld [vmem:[#allocation2 + $0x4] sm:$0xf]
    %v297 = vld [vmem:[#allocation2 + $0x8] sm:$0xf]
    %v298 = vld [vmem:[#allocation2 + $0xc] sm:$0xf]
    %v299 = vld [vmem:[#allocation2 + $0x10] sm:$0xf]
    %v300 = vld [vmem:[#allocation2 + $0x14] sm:$0xf]
    %v301 = vld [vmem:[#allocation2 + $0x18] sm:$0xf]
    %v302 = vld [vmem:[#allocation2 + $0x1c] sm:$0xf]
    %v303 = vld [vmem:[#allocation2 + $0x20] sm:$0xf]
    %v304 = vld [vmem:[#allocation2 + $0x24] sm:$0xf]
    %v305 = vld [vmem:[#allocation2 + $0x28] sm:$0xf]
    %v306 = vld [vmem:[#allocation2 + $0x2c] sm:$0xf]
    %v307 = vld [vmem:[#allocation2 + $0x30] sm:$0xf]
    %v308 = vld [vmem:[#allocation2 + $0x34] sm:$0xf]
    %v309 = vld [vmem:[#allocation2 + $0x38] sm:$0xf]
    %v310 = vld [vmem:[#allocation2 + $0x3c] sm:$0xf]
    %v311 = vpack.c.bf16 %v232, %v229
    %v312 = vpack.c.bf16 %v240, %v237
    %v313 = vpack.c.bf16 %v248, %v245
    %v314 = vpack.c.bf16 %v256, %v253
    %v315 = vpack.c.bf16 %v264, %v261
    %v316 = vpack.c.bf16 %v272, %v269
    %v317 = vpack.c.bf16 %v280, %v277
    %v318 = vpack.c.bf16 %v288, %v285
    %v319 = vld [vmem:[#allocation4] sm:$0x1]
    %v321 = vlaneseq
    %v322 = vshrl.u32 %v321, 7
    %v323 = vsub.s32 0, %v322
    %v324 = vrot.slane %v319, %v323
    %v342 = vunpack.c.l.b16 %v295
    %v343 = vunpack.c.l.b16 %v296
    %v344 = vunpack.c.l.b16 %v297
    %v345 = vunpack.c.l.b16 %v298
    %v346 = vunpack.c.l.b16 %v299
    %v347 = vunpack.c.l.b16 %v300
    %v348 = vunpack.c.l.b16 %v301
    %v349 = vunpack.c.l.b16 %v302
    %v350 = vunpack.c.l.b16 %v303
    %v351 = vunpack.c.l.b16 %v304
    %v352 = vunpack.c.l.b16 %v305
    %v353 = vunpack.c.l.b16 %v306
    %v354 = vunpack.c.l.b16 %v307
    %v355 = vunpack.c.l.b16 %v308
    %v356 = vunpack.c.l.b16 %v309
    %v357 = vunpack.c.l.b16 %v310
    %v358 = vpack.c.b16 %v343, %v342
    %v359 = vpack.c.b16 %v345, %v344
    %v360 = vpack.c.b16 %v347, %v346
    %v361 = vpack.c.b16 %v349, %v348
    %v362 = vpack.c.b16 %v351, %v350
    %v363 = vpack.c.b16 %v353, %v352
    %v364 = vpack.c.b16 %v355, %v354
    %v365 = vpack.c.b16 %v357, %v356
    %374 = vmatprep.subr.bf16.mxu0 0
    %375 = vmatpush1.bf16.msra.mxu0 %v318
    %376 = vmatprep.subr.bf16.mxu0 0
    %377 = vmatpush1.bf16.msra.mxu0 %v317
    %378 = vmatprep.subr.bf16.mxu0 0
    %379 = vmatpush1.bf16.msra.mxu0 %v316
    %380 = vmatprep.subr.bf16.mxu0 0
    %381 = vmatpush1.bf16.msra.mxu0 %v315
    %382 = vmatprep.subr.bf16.mxu0 0
    %383 = vmatpush1.bf16.msra.mxu0 %v314
    %384 = vmatprep.subr.bf16.mxu0 0
    %385 = vmatpush1.bf16.msra.mxu0 %v313
    %386 = vmatprep.subr.bf16.mxu0 0
    %387 = vmatpush1.bf16.msra.mxu0 %v312
    %388 = vmatprep.subr.bf16.mxu0 0
    %389 = vmatpush1.bf16.msra.mxu0 %v311
    %390 = vmatprep.subr.bf16.mxu0 0
    %391 = vmatpush2.bf16.msra.mxu0 0
    %392 = vmatprep.subr.bf16.mxu0 0
    %393 = vmatpush2.bf16.msra.mxu0 0
    %394 = vmatprep.subr.bf16.mxu0 0
    %395 = vmatpush2.bf16.msra.mxu0 0
    %396 = vmatprep.subr.bf16.mxu0 0
    %397 = vmatpush2.bf16.msra.mxu0 0
    %398 = vmatprep.subr.bf16.mxu0 0
    %399 = vmatpush2.bf16.msra.mxu0 0
    %400 = vmatprep.subr.bf16.mxu0 0
    %401 = vmatpush2.bf16.msra.mxu0 0
    %402 = vmatprep.subr.bf16.mxu0 0
    %403 = vmatpush2.bf16.msra.mxu0 0
    %404 = vmatprep.subr.bf16.mxu0 0
    %405 = vmatpush2.bf16.msra.mxu0 0
    %406 = vmatprep.mubr.bf16.mxu0 0
    %407 = vmatmul.mubr.bf16.gmra.mxu0 %v358
    %v408 = vpop.f32.mrf.mxu0
    %v409 = vadd.f32 %v324, %v408
    %v410 = vpop.f32.mrf.mxu0
    %v411 = vpop.f32.mrf.mxu0
    %v412 = vadd.f32 %v324, %v411
    %v413 = vpop.f32.mrf.mxu0
    %414 = vmatprep.mubr.bf16.mxu0 0
    %415 = vmatmul.mubr.bf16.gmra.mxu0 %v359
    %v416 = vpop.f32.mrf.mxu0
    %v417 = vadd.f32 %v324, %v416
    %v418 = vpop.f32.mrf.mxu0
    %v419 = vpop.f32.mrf.mxu0
    %v420 = vadd.f32 %v324, %v419
    %v421 = vpop.f32.mrf.mxu0
    %422 = vmatprep.mubr.bf16.mxu0 0
    %423 = vmatmul.mubr.bf16.gmra.mxu0 %v360
    %v424 = vpop.f32.mrf.mxu0
    %v425 = vadd.f32 %v324, %v424
    %v426 = vpop.f32.mrf.mxu0
    %v427 = vpop.f32.mrf.mxu0
    %v428 = vadd.f32 %v324, %v427
    %v429 = vpop.f32.mrf.mxu0
    %430 = vmatprep.mubr.bf16.mxu0 0
    %431 = vmatmul.mubr.bf16.gmra.mxu0 %v361
    %v432 = vpop.f32.mrf.mxu0
    %v433 = vadd.f32 %v324, %v432
    %v434 = vpop.f32.mrf.mxu0
    %v435 = vpop.f32.mrf.mxu0
    %v436 = vadd.f32 %v324, %v435
    %v437 = vpop.f32.mrf.mxu0
    %438 = vmatprep.mubr.bf16.mxu0 0
    %439 = vmatmul.mubr.bf16.gmra.mxu0 %v362
    %v440 = vpop.f32.mrf.mxu0
    %v441 = vadd.f32 %v324, %v440
    %v442 = vpop.f32.mrf.mxu0
    %v443 = vpop.f32.mrf.mxu0
    %v444 = vadd.f32 %v324, %v443
    %v445 = vpop.f32.mrf.mxu0
    %446 = vmatprep.mubr.bf16.mxu0 0
    %447 = vmatmul.mubr.bf16.gmra.mxu0 %v363
    %v448 = vpop.f32.mrf.mxu0
    %v449 = vadd.f32 %v324, %v448
    %v450 = vpop.f32.mrf.mxu0
    %v451 = vpop.f32.mrf.mxu0
    %v452 = vadd.f32 %v324, %v451
    %v453 = vpop.f32.mrf.mxu0
    %454 = vmatprep.mubr.bf16.mxu0 0
    %455 = vmatmul.mubr.bf16.gmra.mxu0 %v364
    %v456 = vpop.f32.mrf.mxu0
    %v457 = vadd.f32 %v324, %v456
    %v458 = vpop.f32.mrf.mxu0
    %v459 = vpop.f32.mrf.mxu0
    %v460 = vadd.f32 %v324, %v459
    %v461 = vpop.f32.mrf.mxu0
    %462 = vmatprep.mubr.bf16.mxu0 0
    %463 = vmatmul.mubr.bf16.gmra.mxu0 %v365
    %v464 = vpop.f32.mrf.mxu0
    %v465 = vadd.f32 %v324, %v464
    %v466 = vpop.f32.mrf.mxu0
    %v467 = vpop.f32.mrf.mxu0
    %v468 = vadd.f32 %v324, %v467
    %v469 = vpop.f32.mrf.mxu0
    %470 = vdwg.mxu0
    %v471 = vmax.f32 %v409, 0.0
    %v472 = vmax.f32 %v412, 0.0
    %v473 = vmax.f32 %v417, 0.0
    %v474 = vmax.f32 %v420, 0.0
    %v475 = vmax.f32 %v425, 0.0
    %v476 = vmax.f32 %v428, 0.0
    %v477 = vmax.f32 %v433, 0.0
    %v478 = vmax.f32 %v436, 0.0
    %v479 = vmax.f32 %v441, 0.0
    %v480 = vmax.f32 %v444, 0.0
    %v481 = vmax.f32 %v449, 0.0
    %v482 = vmax.f32 %v452, 0.0
    %v483 = vmax.f32 %v457, 0.0
    %v484 = vmax.f32 %v460, 0.0
    %v485 = vmax.f32 %v465, 0.0
    %v486 = vmax.f32 %v468, 0.0
    %v487 = vpack.c.bf16 %v472, %v471
    %v488 = vpack.c.bf16 %v474, %v473
    %v489 = vpack.c.bf16 %v476, %v475
    %v490 = vpack.c.bf16 %v478, %v477
    %v491 = vpack.c.bf16 %v480, %v479
    %v492 = vpack.c.bf16 %v482, %v481
    %v493 = vpack.c.bf16 %v484, %v483
    %v494 = vpack.c.bf16 %v486, %v485
    %v495 = vld [vmem:[%s3] sm:$0xf]
    %v496 = vld [vmem:[%s3 + $0x4] sm:$0xf]
    %v499 = vunpack.c.l.b16 %v495
    %v500 = vunpack.c.l.b16 %v496
    %v501 = vpack.c.b16 %v500, %v499
    %vm503 = vcmask 130048
    %v505 = vsel %vm503, %v487, 0
    %v508 = vsel %vm503, %v488, 0
    %v511 = vsel %vm503, %v489, 0
    %v514 = vsel %vm503, %v490, 0
    %v517 = vsel %vm503, %v491, 0
    %v520 = vsel %vm503, %v492, 0
    %v523 = vsel %vm503, %v493, 0
    %v526 = vsel %vm503, %v494, 0
    %528 = vmatprep.subr.bf16.mxu0 0
    %529 = vmatpush1.bf16.msra.mxu0 0
    %530 = vmatprep.subr.bf16.mxu0 0
    %531 = vmatpush1.bf16.msra.mxu0 0
    %532 = vmatprep.subr.bf16.mxu0 0
    %533 = vmatpush1.bf16.msra.mxu0 0
    %534 = vmatprep.subr.bf16.mxu0 0
    %535 = vmatpush1.bf16.msra.mxu0 0
    %536 = vmatprep.subr.bf16.mxu0 0
    %537 = vmatpush1.bf16.msra.mxu0 0
    %538 = vmatprep.subr.bf16.mxu0 0
    %539 = vmatpush1.bf16.msra.mxu0 0
    %540 = vmatprep.subr.bf16.mxu0 0
    %541 = vmatpush1.bf16.msra.mxu0 0
    %542 = vmatprep.subr.bf16.mxu0 0
    %543 = vmatpush1.bf16.msra.mxu0 %v501
    %544 = vmatprep.subr.bf16.mxu0 0
    %545 = vmatpush2.bf16.msra.mxu0 0
    %546 = vmatprep.subr.bf16.mxu0 0
    %547 = vmatpush2.bf16.msra.mxu0 0
    %548 = vmatprep.subr.bf16.mxu0 0
    %549 = vmatpush2.bf16.msra.mxu0 0
    %550 = vmatprep.subr.bf16.mxu0 0
    %551 = vmatpush2.bf16.msra.mxu0 0
    %552 = vmatprep.subr.bf16.mxu0 0
    %553 = vmatpush2.bf16.msra.mxu0 0
    %554 = vmatprep.subr.bf16.mxu0 0
    %555 = vmatpush2.bf16.msra.mxu0 0
    %556 = vmatprep.subr.bf16.mxu0 0
    %557 = vmatpush2.bf16.msra.mxu0 0
    %558 = vmatprep.subr.bf16.mxu0 0
    %559 = vmatpush2.bf16.msra.mxu0 0
    %560 = vmatprep.mubr.bf16.mxu0 0
    %561 = vmatmul.mubr.bf16.gmra.mxu0 %v505
    %v562 = vpop.f32.mrf.mxu0
    %v563 = vadd.f32 0.0, %v562
    %v564 = vpop.f32.mrf.mxu0
    %v565 = vpop.f32.mrf.mxu0
    %v566 = vadd.f32 0.0, %v565
    %v567 = vpop.f32.mrf.mxu0
    %568 = vmatprep.mubr.bf16.mxu0 0
    %569 = vmatmul.mubr.bf16.gmra.mxu0 %v508
    %v570 = vpop.f32.mrf.mxu0
    %v571 = vadd.f32 0.0, %v570
    %v572 = vpop.f32.mrf.mxu0
    %v573 = vpop.f32.mrf.mxu0
    %v574 = vadd.f32 0.0, %v573
    %v575 = vpop.f32.mrf.mxu0
    %576 = vmatprep.mubr.bf16.mxu0 0
    %577 = vmatmul.mubr.bf16.gmra.mxu0 %v511
    %v578 = vpop.f32.mrf.mxu0
    %v579 = vadd.f32 0.0, %v578
    %v580 = vpop.f32.mrf.mxu0
    %v581 = vpop.f32.mrf.mxu0
    %v582 = vadd.f32 0.0, %v581
    %v583 = vpop.f32.mrf.mxu0
    %584 = vmatprep.mubr.bf16.mxu0 0
    %585 = vmatmul.mubr.bf16.gmra.mxu0 %v514
    %v586 = vpop.f32.mrf.mxu0
    %v587 = vadd.f32 0.0, %v586
    %v588 = vpop.f32.mrf.mxu0
    %v589 = vpop.f32.mrf.mxu0
    %v590 = vadd.f32 0.0, %v589
    %v591 = vpop.f32.mrf.mxu0
    %592 = vmatprep.mubr.bf16.mxu0 0
    %593 = vmatmul.mubr.bf16.gmra.mxu0 %v517
    %v594 = vpop.f32.mrf.mxu0
    %v595 = vadd.f32 0.0, %v594
    %v596 = vpop.f32.mrf.mxu0
    %v597 = vpop.f32.mrf.mxu0
    %v598 = vadd.f32 0.0, %v597
    %v599 = vpop.f32.mrf.mxu0
    %600 = vmatprep.mubr.bf16.mxu0 0
    %601 = vmatmul.mubr.bf16.gmra.mxu0 %v520
    %v602 = vpop.f32.mrf.mxu0
    %v603 = vadd.f32 0.0, %v602
    %v604 = vpop.f32.mrf.mxu0
    %v605 = vpop.f32.mrf.mxu0
    %v606 = vadd.f32 0.0, %v605
    %v607 = vpop.f32.mrf.mxu0
    %608 = vmatprep.mubr.bf16.mxu0 0
    %609 = vmatmul.mubr.bf16.gmra.mxu0 %v523
    %v610 = vpop.f32.mrf.mxu0
    %v611 = vadd.f32 0.0, %v610
    %v612 = vpop.f32.mrf.mxu0
    %v613 = vpop.f32.mrf.mxu0
    %v614 = vadd.f32 0.0, %v613
    %v615 = vpop.f32.mrf.mxu0
    %616 = vmatprep.mubr.bf16.mxu0 0
    %617 = vmatmul.mubr.bf16.gmra.mxu0 %v526
    %v618 = vpop.f32.mrf.mxu0
    %v619 = vadd.f32 0.0, %v618
    %v620 = vpop.f32.mrf.mxu0
    %v621 = vpop.f32.mrf.mxu0
    %v622 = vadd.f32 0.0, %v621
    %v623 = vpop.f32.mrf.mxu0
    %624 = vdwg.mxu0
    %v625 = vpack.c.bf16 %v566, %v563
    %v626 = vpack.c.bf16 %v574, %v571
    %v627 = vpack.c.bf16 %v582, %v579
    %v628 = vpack.c.bf16 %v590, %v587
    %v629 = vpack.c.bf16 %v598, %v595
    %v630 = vpack.c.bf16 %v606, %v603
    %v631 = vpack.c.bf16 %v614, %v611
    %v632 = vpack.c.bf16 %v622, %v619
    %s633 = scalar_lea.vmem [#allocation4], 1
    %v634 = vld [vmem:[%s633] sm:$0x1]
    %v636 = vlaneseq
    %v637 = vshrl.u32 %v636, 7
    %v638 = vsub.s32 0, %v637
    %v639 = vrot.slane %v634, %v638
    %641 = vmatprep.subr.bf16.mxu0 0
    %642 = vmatpush1.bf16.msra.mxu0 %v632
    %643 = vmatprep.subr.bf16.mxu0 0
    %644 = vmatpush1.bf16.msra.mxu0 %v631
    %645 = vmatprep.subr.bf16.mxu0 0
    %646 = vmatpush1.bf16.msra.mxu0 %v630
    %647 = vmatprep.subr.bf16.mxu0 0
    %648 = vmatpush1.bf16.msra.mxu0 %v629
    %649 = vmatprep.subr.bf16.mxu0 0
    %650 = vmatpush1.bf16.msra.mxu0 %v628
    %651 = vmatprep.subr.bf16.mxu0 0
    %652 = vmatpush1.bf16.msra.mxu0 %v627
    %653 = vmatprep.subr.bf16.mxu0 0
    %654 = vmatpush1.bf16.msra.mxu0 %v626
    %655 = vmatprep.subr.bf16.mxu0 0
    %656 = vmatpush1.bf16.msra.mxu0 %v625
    %657 = vmatprep.subr.bf16.mxu0 0
    %658 = vmatpush2.bf16.msra.mxu0 0
    %659 = vmatprep.subr.bf16.mxu0 0
    %660 = vmatpush2.bf16.msra.mxu0 0
    %661 = vmatprep.subr.bf16.mxu0 0
    %662 = vmatpush2.bf16.msra.mxu0 0
    %663 = vmatprep.subr.bf16.mxu0 0
    %664 = vmatpush2.bf16.msra.mxu0 0
    %665 = vmatprep.subr.bf16.mxu0 0
    %666 = vmatpush2.bf16.msra.mxu0 0
    %667 = vmatprep.subr.bf16.mxu0 0
    %668 = vmatpush2.bf16.msra.mxu0 0
    %669 = vmatprep.subr.bf16.mxu0 0
    %670 = vmatpush2.bf16.msra.mxu0 0
    %671 = vmatprep.subr.bf16.mxu0 0
    %672 = vmatpush2.bf16.msra.mxu0 0
    %673 = vmatprep.mubr.bf16.mxu0 0
    %674 = vmatmul.mubr.bf16.gmra.mxu0 %v358
    %v675 = vpop.f32.mrf.mxu0
    %v676 = vadd.f32 %v639, %v675
    %v677 = vpop.f32.mrf.mxu0
    %v678 = vpop.f32.mrf.mxu0
    %v679 = vadd.f32 %v639, %v678
    %v680 = vpop.f32.mrf.mxu0
    %681 = vmatprep.mubr.bf16.mxu0 0
    %682 = vmatmul.mubr.bf16.gmra.mxu0 %v359
    %v683 = vpop.f32.mrf.mxu0
    %v684 = vadd.f32 %v639, %v683
    %v685 = vpop.f32.mrf.mxu0
    %v686 = vpop.f32.mrf.mxu0
    %v687 = vadd.f32 %v639, %v686
    %v688 = vpop.f32.mrf.mxu0
    %689 = vmatprep.mubr.bf16.mxu0 0
    %690 = vmatmul.mubr.bf16.gmra.mxu0 %v360
    %v691 = vpop.f32.mrf.mxu0
    %v692 = vadd.f32 %v639, %v691
    %v693 = vpop.f32.mrf.mxu0
    %v694 = vpop.f32.mrf.mxu0
    %v695 = vadd.f32 %v639, %v694
    %v696 = vpop.f32.mrf.mxu0
    %697 = vmatprep.mubr.bf16.mxu0 0
    %698 = vmatmul.mubr.bf16.gmra.mxu0 %v361
    %v699 = vpop.f32.mrf.mxu0
    %v700 = vadd.f32 %v639, %v699
    %v701 = vpop.f32.mrf.mxu0
    %v702 = vpop.f32.mrf.mxu0
    %v703 = vadd.f32 %v639, %v702
    %v704 = vpop.f32.mrf.mxu0
    %705 = vmatprep.mubr.bf16.mxu0 0
    %706 = vmatmul.mubr.bf16.gmra.mxu0 %v362
    %v707 = vpop.f32.mrf.mxu0
    %v708 = vadd.f32 %v639, %v707
    %v709 = vpop.f32.mrf.mxu0
    %v710 = vpop.f32.mrf.mxu0
    %v711 = vadd.f32 %v639, %v710
    %v712 = vpop.f32.mrf.mxu0
    %713 = vmatprep.mubr.bf16.mxu0 0
    %714 = vmatmul.mubr.bf16.gmra.mxu0 %v363
    %v715 = vpop.f32.mrf.mxu0
    %v716 = vadd.f32 %v639, %v715
    %v717 = vpop.f32.mrf.mxu0
    %v718 = vpop.f32.mrf.mxu0
    %v719 = vadd.f32 %v639, %v718
    %v720 = vpop.f32.mrf.mxu0
    %721 = vmatprep.mubr.bf16.mxu0 0
    %722 = vmatmul.mubr.bf16.gmra.mxu0 %v364
    %v723 = vpop.f32.mrf.mxu0
    %v724 = vadd.f32 %v639, %v723
    %v725 = vpop.f32.mrf.mxu0
    %v726 = vpop.f32.mrf.mxu0
    %v727 = vadd.f32 %v639, %v726
    %v728 = vpop.f32.mrf.mxu0
    %729 = vmatprep.mubr.bf16.mxu0 0
    %730 = vmatmul.mubr.bf16.gmra.mxu0 %v365
    %v731 = vpop.f32.mrf.mxu0
    %v732 = vadd.f32 %v639, %v731
    %v733 = vpop.f32.mrf.mxu0
    %v734 = vpop.f32.mrf.mxu0
    %v735 = vadd.f32 %v639, %v734
    %v736 = vpop.f32.mrf.mxu0
    %737 = vdwg.mxu0
    %v738 = vmax.f32 %v676, 0.0
    %v739 = vmax.f32 %v679, 0.0
    %v740 = vmax.f32 %v684, 0.0
    %v741 = vmax.f32 %v687, 0.0
    %v742 = vmax.f32 %v692, 0.0
    %v743 = vmax.f32 %v695, 0.0
    %v744 = vmax.f32 %v700, 0.0
    %v745 = vmax.f32 %v703, 0.0
    %v746 = vmax.f32 %v708, 0.0
    %v747 = vmax.f32 %v711, 0.0
    %v748 = vmax.f32 %v716, 0.0
    %v749 = vmax.f32 %v719, 0.0
    %v750 = vmax.f32 %v724, 0.0
    %v751 = vmax.f32 %v727, 0.0
    %v752 = vmax.f32 %v732, 0.0
    %v753 = vmax.f32 %v735, 0.0
    %v754 = vmax.f32 %v471, %v738
    %v755 = vmax.f32 %v472, %v739
    %v756 = vmax.f32 %v473, %v740
    %v757 = vmax.f32 %v474, %v741
    %v758 = vmax.f32 %v475, %v742
    %v759 = vmax.f32 %v476, %v743
    %v760 = vmax.f32 %v477, %v744
    %v761 = vmax.f32 %v478, %v745
    %v762 = vmax.f32 %v479, %v746
    %v763 = vmax.f32 %v480, %v747
    %v764 = vmax.f32 %v481, %v748
    %v765 = vmax.f32 %v482, %v749
    %v766 = vmax.f32 %v483, %v750
    %v767 = vmax.f32 %v484, %v751
    %v768 = vmax.f32 %v485, %v752
    %v769 = vmax.f32 %v486, %v753
    %v770 = vpack.c.bf16 %v739, %v738
    %v771 = vpack.c.bf16 %v741, %v740
    %v772 = vpack.c.bf16 %v743, %v742
    %v773 = vpack.c.bf16 %v745, %v744
    %v774 = vpack.c.bf16 %v747, %v746
    %v775 = vpack.c.bf16 %v749, %v748
    %v776 = vpack.c.bf16 %v751, %v750
    %v777 = vpack.c.bf16 %v753, %v752
    %s778 = scalar_lea.vmem %s3, 8
    %v779 = vld [vmem:[%s778] sm:$0xf]
    %v780 = vld [vmem:[%s778 + $0x4] sm:$0xf]
    %v783 = vunpack.c.l.b16 %v779
    %v784 = vunpack.c.l.b16 %v780
    %v785 = vpack.c.b16 %v784, %v783
    %v788 = vsel %vm503, %v770, 0
    %v791 = vsel %vm503, %v771, 0
    %v794 = vsel %vm503, %v772, 0
    %v797 = vsel %vm503, %v773, 0
    %v800 = vsel %vm503, %v774, 0
    %v803 = vsel %vm503, %v775, 0
    %v806 = vsel %vm503, %v776, 0
    %v809 = vsel %vm503, %v777, 0
    %811 = vmatprep.subr.bf16.mxu0 0
    %812 = vmatpush1.bf16.msra.mxu0 0
    %813 = vmatprep.subr.bf16.mxu0 0
    %814 = vmatpush1.bf16.msra.mxu0 0
    %815 = vmatprep.subr.bf16.mxu0 0
    %816 = vmatpush1.bf16.msra.mxu0 0
    %817 = vmatprep.subr.bf16.mxu0 0
    %818 = vmatpush1.bf16.msra.mxu0 0
    %819 = vmatprep.subr.bf16.mxu0 0
    %820 = vmatpush1.bf16.msra.mxu0 0
    %821 = vmatprep.subr.bf16.mxu0 0
    %822 = vmatpush1.bf16.msra.mxu0 0
    %823 = vmatprep.subr.bf16.mxu0 0
    %824 = vmatpush1.bf16.msra.mxu0 0
    %825 = vmatprep.subr.bf16.mxu0 0
    %826 = vmatpush1.bf16.msra.mxu0 %v785
    %827 = vmatprep.subr.bf16.mxu0 0
    %828 = vmatpush2.bf16.msra.mxu0 0
    %829 = vmatprep.subr.bf16.mxu0 0
    %830 = vmatpush2.bf16.msra.mxu0 0
    %831 = vmatprep.subr.bf16.mxu0 0
    %832 = vmatpush2.bf16.msra.mxu0 0
    %833 = vmatprep.subr.bf16.mxu0 0
    %834 = vmatpush2.bf16.msra.mxu0 0
    %835 = vmatprep.subr.bf16.mxu0 0
    %836 = vmatpush2.bf16.msra.mxu0 0
    %837 = vmatprep.subr.bf16.mxu0 0
    %838 = vmatpush2.bf16.msra.mxu0 0
    %839 = vmatprep.subr.bf16.mxu0 0
    %840 = vmatpush2.bf16.msra.mxu0 0
    %841 = vmatprep.subr.bf16.mxu0 0
    %842 = vmatpush2.bf16.msra.mxu0 0
    %843 = vmatprep.mubr.bf16.mxu0 0
    %844 = vmatmul.mubr.bf16.gmra.mxu0 %v788
    %v845 = vpop.f32.mrf.mxu0
    %v846 = vadd.f32 0.0, %v845
    %v847 = vpop.f32.mrf.mxu0
    %v848 = vpop.f32.mrf.mxu0
    %v849 = vadd.f32 0.0, %v848
    %v850 = vpop.f32.mrf.mxu0
    %851 = vmatprep.mubr.bf16.mxu0 0
    %852 = vmatmul.mubr.bf16.gmra.mxu0 %v791
    %v853 = vpop.f32.mrf.mxu0
    %v854 = vadd.f32 0.0, %v853
    %v855 = vpop.f32.mrf.mxu0
    %v856 = vpop.f32.mrf.mxu0
    %v857 = vadd.f32 0.0, %v856
    %v858 = vpop.f32.mrf.mxu0
    %859 = vmatprep.mubr.bf16.mxu0 0
    %860 = vmatmul.mubr.bf16.gmra.mxu0 %v794
    %v861 = vpop.f32.mrf.mxu0
    %v862 = vadd.f32 0.0, %v861
    %v863 = vpop.f32.mrf.mxu0
    %v864 = vpop.f32.mrf.mxu0
    %v865 = vadd.f32 0.0, %v864
    %v866 = vpop.f32.mrf.mxu0
    %867 = vmatprep.mubr.bf16.mxu0 0
    %868 = vmatmul.mubr.bf16.gmra.mxu0 %v797
    %v869 = vpop.f32.mrf.mxu0
    %v870 = vadd.f32 0.0, %v869
    %v871 = vpop.f32.mrf.mxu0
    %v872 = vpop.f32.mrf.mxu0
    %v873 = vadd.f32 0.0, %v872
    %v874 = vpop.f32.mrf.mxu0
    %875 = vmatprep.mubr.bf16.mxu0 0
    %876 = vmatmul.mubr.bf16.gmra.mxu0 %v800
    %v877 = vpop.f32.mrf.mxu0
    %v878 = vadd.f32 0.0, %v877
    %v879 = vpop.f32.mrf.mxu0
    %v880 = vpop.f32.mrf.mxu0
    %v881 = vadd.f32 0.0, %v880
    %v882 = vpop.f32.mrf.mxu0
    %883 = vmatprep.mubr.bf16.mxu0 0
    %884 = vmatmul.mubr.bf16.gmra.mxu0 %v803
    %v885 = vpop.f32.mrf.mxu0
    %v886 = vadd.f32 0.0, %v885
    %v887 = vpop.f32.mrf.mxu0
    %v888 = vpop.f32.mrf.mxu0
    %v889 = vadd.f32 0.0, %v888
    %v890 = vpop.f32.mrf.mxu0
    %891 = vmatprep.mubr.bf16.mxu0 0
    %892 = vmatmul.mubr.bf16.gmra.mxu0 %v806
    %v893 = vpop.f32.mrf.mxu0
    %v894 = vadd.f32 0.0, %v893
    %v895 = vpop.f32.mrf.mxu0
    %v896 = vpop.f32.mrf.mxu0
    %v897 = vadd.f32 0.0, %v896
    %v898 = vpop.f32.mrf.mxu0
    %899 = vmatprep.mubr.bf16.mxu0 0
    %900 = vmatmul.mubr.bf16.gmra.mxu0 %v809
    %v901 = vpop.f32.mrf.mxu0
    %v902 = vadd.f32 0.0, %v901
    %v903 = vpop.f32.mrf.mxu0
    %v904 = vpop.f32.mrf.mxu0
    %v905 = vadd.f32 0.0, %v904
    %v906 = vpop.f32.mrf.mxu0
    %907 = vdwg.mxu0
    %v908 = vpack.c.bf16 %v849, %v846
    %v909 = vpack.c.bf16 %v857, %v854
    %v910 = vpack.c.bf16 %v865, %v862
    %v911 = vpack.c.bf16 %v873, %v870
    %v912 = vpack.c.bf16 %v881, %v878
    %v913 = vpack.c.bf16 %v889, %v886
    %v914 = vpack.c.bf16 %v897, %v894
    %v915 = vpack.c.bf16 %v905, %v902
    %s916 = scalar_lea.vmem [#allocation4], 2
    %v917 = vld [vmem:[%s916] sm:$0x1]
    %v919 = vlaneseq
    %v920 = vshrl.u32 %v919, 7
    %v921 = vsub.s32 0, %v920
    %v922 = vrot.slane %v917, %v921
    %924 = vmatprep.subr.bf16.mxu0 0
    %925 = vmatpush1.bf16.msra.mxu0 %v915
    %926 = vmatprep.subr.bf16.mxu0 0
    %927 = vmatpush1.bf16.msra.mxu0 %v914
    %928 = vmatprep.subr.bf16.mxu0 0
    %929 = vmatpush1.bf16.msra.mxu0 %v913
    %930 = vmatprep.subr.bf16.mxu0 0
    %931 = vmatpush1.bf16.msra.mxu0 %v912
    %932 = vmatprep.subr.bf16.mxu0 0
    %933 = vmatpush1.bf16.msra.mxu0 %v911
    %934 = vmatprep.subr.bf16.mxu0 0
    %935 = vmatpush1.bf16.msra.mxu0 %v910
    %936 = vmatprep.subr.bf16.mxu0 0
    %937 = vmatpush1.bf16.msra.mxu0 %v909
    %938 = vmatprep.subr.bf16.mxu0 0
    %939 = vmatpush1.bf16.msra.mxu0 %v908
    %940 = vmatprep.subr.bf16.mxu0 0
    %941 = vmatpush2.bf16.msra.mxu0 0
    %942 = vmatprep.subr.bf16.mxu0 0
    %943 = vmatpush2.bf16.msra.mxu0 0
    %944 = vmatprep.subr.bf16.mxu0 0
    %945 = vmatpush2.bf16.msra.mxu0 0
    %946 = vmatprep.subr.bf16.mxu0 0
    %947 = vmatpush2.bf16.msra.mxu0 0
    %948 = vmatprep.subr.bf16.mxu0 0
    %949 = vmatpush2.bf16.msra.mxu0 0
    %950 = vmatprep.subr.bf16.mxu0 0
    %951 = vmatpush2.bf16.msra.mxu0 0
    %952 = vmatprep.subr.bf16.mxu0 0
    %953 = vmatpush2.bf16.msra.mxu0 0
    %954 = vmatprep.subr.bf16.mxu0 0
    %955 = vmatpush2.bf16.msra.mxu0 0
    %956 = vmatprep.mubr.bf16.mxu0 0
    %957 = vmatmul.mubr.bf16.gmra.mxu0 %v358
    %v958 = vpop.f32.mrf.mxu0
    %v959 = vadd.f32 %v922, %v958
    %v960 = vpop.f32.mrf.mxu0
    %v961 = vpop.f32.mrf.mxu0
    %v962 = vadd.f32 %v922, %v961
    %v963 = vpop.f32.mrf.mxu0
    %964 = vmatprep.mubr.bf16.mxu0 0
    %965 = vmatmul.mubr.bf16.gmra.mxu0 %v359
    %v966 = vpop.f32.mrf.mxu0
    %v967 = vadd.f32 %v922, %v966
    %v968 = vpop.f32.mrf.mxu0
    %v969 = vpop.f32.mrf.mxu0
    %v970 = vadd.f32 %v922, %v969
    %v971 = vpop.f32.mrf.mxu0
    %972 = vmatprep.mubr.bf16.mxu0 0
    %973 = vmatmul.mubr.bf16.gmra.mxu0 %v360
    %v974 = vpop.f32.mrf.mxu0
    %v975 = vadd.f32 %v922, %v974
    %v976 = vpop.f32.mrf.mxu0
    %v977 = vpop.f32.mrf.mxu0
    %v978 = vadd.f32 %v922, %v977
    %v979 = vpop.f32.mrf.mxu0
    %980 = vmatprep.mubr.bf16.mxu0 0
    %981 = vmatmul.mubr.bf16.gmra.mxu0 %v361
    %v982 = vpop.f32.mrf.mxu0
    %v983 = vadd.f32 %v922, %v982
    %v984 = vpop.f32.mrf.mxu0
    %v985 = vpop.f32.mrf.mxu0
    %v986 = vadd.f32 %v922, %v985
    %v987 = vpop.f32.mrf.mxu0
    %988 = vmatprep.mubr.bf16.mxu0 0
    %989 = vmatmul.mubr.bf16.gmra.mxu0 %v362
    %v990 = vpop.f32.mrf.mxu0
    %v991 = vadd.f32 %v922, %v990
    %v992 = vpop.f32.mrf.mxu0
    %v993 = vpop.f32.mrf.mxu0
    %v994 = vadd.f32 %v922, %v993
    %v995 = vpop.f32.mrf.mxu0
    %996 = vmatprep.mubr.bf16.mxu0 0
    %997 = vmatmul.mubr.bf16.gmra.mxu0 %v363
    %v998 = vpop.f32.mrf.mxu0
    %v999 = vadd.f32 %v922, %v998
    %v1000 = vpop.f32.mrf.mxu0
    %v1001 = vpop.f32.mrf.mxu0
    %v1002 = vadd.f32 %v922, %v1001
    %v1003 = vpop.f32.mrf.mxu0
    %1004 = vmatprep.mubr.bf16.mxu0 0
    %1005 = vmatmul.mubr.bf16.gmra.mxu0 %v364
    %v1006 = vpop.f32.mrf.mxu0
    %v1007 = vadd.f32 %v922, %v1006
    %v1008 = vpop.f32.mrf.mxu0
    %v1009 = vpop.f32.mrf.mxu0
    %v1010 = vadd.f32 %v922, %v1009
    %v1011 = vpop.f32.mrf.mxu0
    %1012 = vmatprep.mubr.bf16.mxu0 0
    %1013 = vmatmul.mubr.bf16.gmra.mxu0 %v365
    %v1014 = vpop.f32.mrf.mxu0
    %v1015 = vadd.f32 %v922, %v1014
    %v1016 = vpop.f32.mrf.mxu0
    %v1017 = vpop.f32.mrf.mxu0
    %v1018 = vadd.f32 %v922, %v1017
    %v1019 = vpop.f32.mrf.mxu0
    %1020 = vdwg.mxu0
    %v1021 = vmax.f32 %v959, 0.0
    %v1022 = vmax.f32 %v962, 0.0
    %v1023 = vmax.f32 %v967, 0.0
    %v1024 = vmax.f32 %v970, 0.0
    %v1025 = vmax.f32 %v975, 0.0
    %v1026 = vmax.f32 %v978, 0.0
    %v1027 = vmax.f32 %v983, 0.0
    %v1028 = vmax.f32 %v986, 0.0
    %v1029 = vmax.f32 %v991, 0.0
    %v1030 = vmax.f32 %v994, 0.0
    %v1031 = vmax.f32 %v999, 0.0
    %v1032 = vmax.f32 %v1002, 0.0
    %v1033 = vmax.f32 %v1007, 0.0
    %v1034 = vmax.f32 %v1010, 0.0
    %v1035 = vmax.f32 %v1015, 0.0
    %v1036 = vmax.f32 %v1018, 0.0
    %v1037 = vmax.f32 %v754, %v1021
    %v1038 = vmax.f32 %v755, %v1022
    %v1039 = vmax.f32 %v756, %v1023
    %v1040 = vmax.f32 %v757, %v1024
    %v1041 = vmax.f32 %v758, %v1025
    %v1042 = vmax.f32 %v759, %v1026
    %v1043 = vmax.f32 %v760, %v1027
    %v1044 = vmax.f32 %v761, %v1028
    %v1045 = vmax.f32 %v762, %v1029
    %v1046 = vmax.f32 %v763, %v1030
    %v1047 = vmax.f32 %v764, %v1031
    %v1048 = vmax.f32 %v765, %v1032
    %v1049 = vmax.f32 %v766, %v1033
    %v1050 = vmax.f32 %v767, %v1034
    %v1051 = vmax.f32 %v768, %v1035
    %v1052 = vmax.f32 %v769, %v1036
    %v1053 = vpack.c.bf16 %v1022, %v1021
    %v1054 = vpack.c.bf16 %v1024, %v1023
    %v1055 = vpack.c.bf16 %v1026, %v1025
    %v1056 = vpack.c.bf16 %v1028, %v1027
    %v1057 = vpack.c.bf16 %v1030, %v1029
    %v1058 = vpack.c.bf16 %v1032, %v1031
    %v1059 = vpack.c.bf16 %v1034, %v1033
    %v1060 = vpack.c.bf16 %v1036, %v1035
    %s1061 = scalar_lea.vmem %s3, 16
    %v1062 = vld [vmem:[%s1061] sm:$0xf]
    %v1063 = vld [vmem:[%s1061 + $0x4] sm:$0xf]
    %v1066 = vunpack.c.l.b16 %v1062
    %v1067 = vunpack.c.l.b16 %v1063
    %v1068 = vpack.c.b16 %v1067, %v1066
    %v1071 = vsel %vm503, %v1053, 0
    %v1074 = vsel %vm503, %v1054, 0
    %v1077 = vsel %vm503, %v1055, 0
    %v1080 = vsel %vm503, %v1056, 0
    %v1083 = vsel %vm503, %v1057, 0
    %v1086 = vsel %vm503, %v1058, 0
    %v1089 = vsel %vm503, %v1059, 0
    %v1092 = vsel %vm503, %v1060, 0
    %1094 = vmatprep.subr.bf16.mxu0 0
    %1095 = vmatpush1.bf16.msra.mxu0 0
    %1096 = vmatprep.subr.bf16.mxu0 0
    %1097 = vmatpush1.bf16.msra.mxu0 0
    %1098 = vmatprep.subr.bf16.mxu0 0
    %1099 = vmatpush1.bf16.msra.mxu0 0
    %1100 = vmatprep.subr.bf16.mxu0 0
    %1101 = vmatpush1.bf16.msra.mxu0 0
    %1102 = vmatprep.subr.bf16.mxu0 0
    %1103 = vmatpush1.bf16.msra.mxu0 0
    %1104 = vmatprep.subr.bf16.mxu0 0
    %1105 = vmatpush1.bf16.msra.mxu0 0
    %1106 = vmatprep.subr.bf16.mxu0 0
    %1107 = vmatpush1.bf16.msra.mxu0 0
    %1108 = vmatprep.subr.bf16.mxu0 0
    %1109 = vmatpush1.bf16.msra.mxu0 %v1068
    %1110 = vmatprep.subr.bf16.mxu0 0
    %1111 = vmatpush2.bf16.msra.mxu0 0
    %1112 = vmatprep.subr.bf16.mxu0 0
    %1113 = vmatpush2.bf16.msra.mxu0 0
    %1114 = vmatprep.subr.bf16.mxu0 0
    %1115 = vmatpush2.bf16.msra.mxu0 0
    %1116 = vmatprep.subr.bf16.mxu0 0
    %1117 = vmatpush2.bf16.msra.mxu0 0
    %1118 = vmatprep.subr.bf16.mxu0 0
    %1119 = vmatpush2.bf16.msra.mxu0 0
    %1120 = vmatprep.subr.bf16.mxu0 0
    %1121 = vmatpush2.bf16.msra.mxu0 0
    %1122 = vmatprep.subr.bf16.mxu0 0
    %1123 = vmatpush2.bf16.msra.mxu0 0
    %1124 = vmatprep.subr.bf16.mxu0 0
    %1125 = vmatpush2.bf16.msra.mxu0 0
    %1126 = vmatprep.mubr.bf16.mxu0 0
    %1127 = vmatmul.mubr.bf16.gmra.mxu0 %v1071
    %v1128 = vpop.f32.mrf.mxu0
    %v1129 = vadd.f32 0.0, %v1128
    %v1130 = vpop.f32.mrf.mxu0
    %v1131 = vpop.f32.mrf.mxu0
    %v1132 = vadd.f32 0.0, %v1131
    %v1133 = vpop.f32.mrf.mxu0
    %1134 = vmatprep.mubr.bf16.mxu0 0
    %1135 = vmatmul.mubr.bf16.gmra.mxu0 %v1074
    %v1136 = vpop.f32.mrf.mxu0
    %v1137 = vadd.f32 0.0, %v1136
    %v1138 = vpop.f32.mrf.mxu0
    %v1139 = vpop.f32.mrf.mxu0
    %v1140 = vadd.f32 0.0, %v1139
    %v1141 = vpop.f32.mrf.mxu0
    %1142 = vmatprep.mubr.bf16.mxu0 0
    %1143 = vmatmul.mubr.bf16.gmra.mxu0 %v1077
    %v1144 = vpop.f32.mrf.mxu0
    %v1145 = vadd.f32 0.0, %v1144
    %v1146 = vpop.f32.mrf.mxu0
    %v1147 = vpop.f32.mrf.mxu0
    %v1148 = vadd.f32 0.0, %v1147
    %v1149 = vpop.f32.mrf.mxu0
    %1150 = vmatprep.mubr.bf16.mxu0 0
    %1151 = vmatmul.mubr.bf16.gmra.mxu0 %v1080
    %v1152 = vpop.f32.mrf.mxu0
    %v1153 = vadd.f32 0.0, %v1152
    %v1154 = vpop.f32.mrf.mxu0
    %v1155 = vpop.f32.mrf.mxu0
    %v1156 = vadd.f32 0.0, %v1155
    %v1157 = vpop.f32.mrf.mxu0
    %1158 = vmatprep.mubr.bf16.mxu0 0
    %1159 = vmatmul.mubr.bf16.gmra.mxu0 %v1083
    %v1160 = vpop.f32.mrf.mxu0
    %v1161 = vadd.f32 0.0, %v1160
    %v1162 = vpop.f32.mrf.mxu0
    %v1163 = vpop.f32.mrf.mxu0
    %v1164 = vadd.f32 0.0, %v1163
    %v1165 = vpop.f32.mrf.mxu0
    %1166 = vmatprep.mubr.bf16.mxu0 0
    %1167 = vmatmul.mubr.bf16.gmra.mxu0 %v1086
    %v1168 = vpop.f32.mrf.mxu0
    %v1169 = vadd.f32 0.0, %v1168
    %v1170 = vpop.f32.mrf.mxu0
    %v1171 = vpop.f32.mrf.mxu0
    %v1172 = vadd.f32 0.0, %v1171
    %v1173 = vpop.f32.mrf.mxu0
    %1174 = vmatprep.mubr.bf16.mxu0 0
    %1175 = vmatmul.mubr.bf16.gmra.mxu0 %v1089
    %v1176 = vpop.f32.mrf.mxu0
    %v1177 = vadd.f32 0.0, %v1176
    %v1178 = vpop.f32.mrf.mxu0
    %v1179 = vpop.f32.mrf.mxu0
    %v1180 = vadd.f32 0.0, %v1179
    %v1181 = vpop.f32.mrf.mxu0
    %1182 = vmatprep.mubr.bf16.mxu0 0
    %1183 = vmatmul.mubr.bf16.gmra.mxu0 %v1092
    %v1184 = vpop.f32.mrf.mxu0
    %v1185 = vadd.f32 0.0, %v1184
    %v1186 = vpop.f32.mrf.mxu0
    %v1187 = vpop.f32.mrf.mxu0
    %v1188 = vadd.f32 0.0, %v1187
    %v1189 = vpop.f32.mrf.mxu0
    %1190 = vdwg.mxu0
    %v1191 = vpack.c.bf16 %v1132, %v1129
    %v1192 = vpack.c.bf16 %v1140, %v1137
    %v1193 = vpack.c.bf16 %v1148, %v1145
    %v1194 = vpack.c.bf16 %v1156, %v1153
    %v1195 = vpack.c.bf16 %v1164, %v1161
    %v1196 = vpack.c.bf16 %v1172, %v1169
    %v1197 = vpack.c.bf16 %v1180, %v1177
    %v1198 = vpack.c.bf16 %v1188, %v1185
    %s1199 = scalar_lea.vmem [#allocation4], 3
    %v1200 = vld [vmem:[%s1199] sm:$0x1]
    %v1202 = vlaneseq
    %v1203 = vshrl.u32 %v1202, 7
    %v1204 = vsub.s32 0, %v1203
    %v1205 = vrot.slane %v1200, %v1204
    %1207 = vmatprep.subr.bf16.mxu0 0
    %1208 = vmatpush1.bf16.msra.mxu0 %v1198
    %1209 = vmatprep.subr.bf16.mxu0 0
    %1210 = vmatpush1.bf16.msra.mxu0 %v1197
    %1211 = vmatprep.subr.bf16.mxu0 0
    %1212 = vmatpush1.bf16.msra.mxu0 %v1196
    %1213 = vmatprep.subr.bf16.mxu0 0
    %1214 = vmatpush1.bf16.msra.mxu0 %v1195
    %1215 = vmatprep.subr.bf16.mxu0 0
    %1216 = vmatpush1.bf16.msra.mxu0 %v1194
    %1217 = vmatprep.subr.bf16.mxu0 0
    %1218 = vmatpush1.bf16.msra.mxu0 %v1193
    %1219 = vmatprep.subr.bf16.mxu0 0
    %1220 = vmatpush1.bf16.msra.mxu0 %v1192
    %1221 = vmatprep.subr.bf16.mxu0 0
    %1222 = vmatpush1.bf16.msra.mxu0 %v1191
    %1223 = vmatprep.subr.bf16.mxu0 0
    %1224 = vmatpush2.bf16.msra.mxu0 0
    %1225 = vmatprep.subr.bf16.mxu0 0
    %1226 = vmatpush2.bf16.msra.mxu0 0
    %1227 = vmatprep.subr.bf16.mxu0 0
    %1228 = vmatpush2.bf16.msra.mxu0 0
    %1229 = vmatprep.subr.bf16.mxu0 0
    %1230 = vmatpush2.bf16.msra.mxu0 0
    %1231 = vmatprep.subr.bf16.mxu0 0
    %1232 = vmatpush2.bf16.msra.mxu0 0
    %1233 = vmatprep.subr.bf16.mxu0 0
    %1234 = vmatpush2.bf16.msra.mxu0 0
    %1235 = vmatprep.subr.bf16.mxu0 0
    %1236 = vmatpush2.bf16.msra.mxu0 0
    %1237 = vmatprep.subr.bf16.mxu0 0
    %1238 = vmatpush2.bf16.msra.mxu0 0
    %1239 = vmatprep.mubr.bf16.mxu0 0
    %1240 = vmatmul.mubr.bf16.gmra.mxu0 %v358
    %v1241 = vpop.f32.mrf.mxu0
    %v1242 = vadd.f32 %v1205, %v1241
    %v1243 = vpop.f32.mrf.mxu0
    %v1244 = vpop.f32.mrf.mxu0
    %v1245 = vadd.f32 %v1205, %v1244
    %v1246 = vpop.f32.mrf.mxu0
    %1247 = vmatprep.mubr.bf16.mxu0 0
    %1248 = vmatmul.mubr.bf16.gmra.mxu0 %v359
    %v1249 = vpop.f32.mrf.mxu0
    %v1250 = vadd.f32 %v1205, %v1249
    %v1251 = vpop.f32.mrf.mxu0
    %v1252 = vpop.f32.mrf.mxu0
    %v1253 = vadd.f32 %v1205, %v1252
    %v1254 = vpop.f32.mrf.mxu0
    %1255 = vmatprep.mubr.bf16.mxu0 0
    %1256 = vmatmul.mubr.bf16.gmra.mxu0 %v360
    %v1257 = vpop.f32.mrf.mxu0
    %v1258 = vadd.f32 %v1205, %v1257
    %v1259 = vpop.f32.mrf.mxu0
    %v1260 = vpop.f32.mrf.mxu0
    %v1261 = vadd.f32 %v1205, %v1260
    %v1262 = vpop.f32.mrf.mxu0
    %1263 = vmatprep.mubr.bf16.mxu0 0
    %1264 = vmatmul.mubr.bf16.gmra.mxu0 %v361
    %v1265 = vpop.f32.mrf.mxu0
    %v1266 = vadd.f32 %v1205, %v1265
    %v1267 = vpop.f32.mrf.mxu0
    %v1268 = vpop.f32.mrf.mxu0
    %v1269 = vadd.f32 %v1205, %v1268
    %v1270 = vpop.f32.mrf.mxu0
    %1271 = vmatprep.mubr.bf16.mxu0 0
    %1272 = vmatmul.mubr.bf16.gmra.mxu0 %v362
    %v1273 = vpop.f32.mrf.mxu0
    %v1274 = vadd.f32 %v1205, %v1273
    %v1275 = vpop.f32.mrf.mxu0
    %v1276 = vpop.f32.mrf.mxu0
    %v1277 = vadd.f32 %v1205, %v1276
    %v1278 = vpop.f32.mrf.mxu0
    %1279 = vmatprep.mubr.bf16.mxu0 0
    %1280 = vmatmul.mubr.bf16.gmra.mxu0 %v363
    %v1281 = vpop.f32.mrf.mxu0
    %v1282 = vadd.f32 %v1205, %v1281
    %v1283 = vpop.f32.mrf.mxu0
    %v1284 = vpop.f32.mrf.mxu0
    %v1285 = vadd.f32 %v1205, %v1284
    %v1286 = vpop.f32.mrf.mxu0
    %1287 = vmatprep.mubr.bf16.mxu0 0
    %1288 = vmatmul.mubr.bf16.gmra.mxu0 %v364
    %v1289 = vpop.f32.mrf.mxu0
    %v1290 = vadd.f32 %v1205, %v1289
    %v1291 = vpop.f32.mrf.mxu0
    %v1292 = vpop.f32.mrf.mxu0
    %v1293 = vadd.f32 %v1205, %v1292
    %v1294 = vpop.f32.mrf.mxu0
    %1295 = vmatprep.mubr.bf16.mxu0 0
    %1296 = vmatmul.mubr.bf16.gmra.mxu0 %v365
    %v1297 = vpop.f32.mrf.mxu0
    %v1298 = vadd.f32 %v1205, %v1297
    %v1299 = vpop.f32.mrf.mxu0
    %v1300 = vpop.f32.mrf.mxu0
    %v1301 = vadd.f32 %v1205, %v1300
    %v1302 = vpop.f32.mrf.mxu0
    %1303 = vdwg.mxu0
    %v1304 = vmax.f32 %v1242, 0.0
    %v1305 = vmax.f32 %v1245, 0.0
    %v1306 = vmax.f32 %v1250, 0.0
    %v1307 = vmax.f32 %v1253, 0.0
    %v1308 = vmax.f32 %v1258, 0.0
    %v1309 = vmax.f32 %v1261, 0.0
    %v1310 = vmax.f32 %v1266, 0.0
    %v1311 = vmax.f32 %v1269, 0.0
    %v1312 = vmax.f32 %v1274, 0.0
    %v1313 = vmax.f32 %v1277, 0.0
    %v1314 = vmax.f32 %v1282, 0.0
    %v1315 = vmax.f32 %v1285, 0.0
    %v1316 = vmax.f32 %v1290, 0.0
    %v1317 = vmax.f32 %v1293, 0.0
    %v1318 = vmax.f32 %v1298, 0.0
    %v1319 = vmax.f32 %v1301, 0.0
    %v1320 = vmax.f32 %v1037, %v1304
    %v1321 = vmax.f32 %v1038, %v1305
    %v1322 = vmax.f32 %v1039, %v1306
    %v1323 = vmax.f32 %v1040, %v1307
    %v1324 = vmax.f32 %v1041, %v1308
    %v1325 = vmax.f32 %v1042, %v1309
    %v1326 = vmax.f32 %v1043, %v1310
    %v1327 = vmax.f32 %v1044, %v1311
    %v1328 = vmax.f32 %v1045, %v1312
    %v1329 = vmax.f32 %v1046, %v1313
    %v1330 = vmax.f32 %v1047, %v1314
    %v1331 = vmax.f32 %v1048, %v1315
    %v1332 = vmax.f32 %v1049, %v1316
    %v1333 = vmax.f32 %v1050, %v1317
    %v1334 = vmax.f32 %v1051, %v1318
    %v1335 = vmax.f32 %v1052, %v1319
    %v1336 = vpack.c.bf16 %v1305, %v1304
    %v1337 = vpack.c.bf16 %v1307, %v1306
    %v1338 = vpack.c.bf16 %v1309, %v1308
    %v1339 = vpack.c.bf16 %v1311, %v1310
    %v1340 = vpack.c.bf16 %v1313, %v1312
    %v1341 = vpack.c.bf16 %v1315, %v1314
    %v1342 = vpack.c.bf16 %v1317, %v1316
    %v1343 = vpack.c.bf16 %v1319, %v1318
    %s1344 = scalar_lea.vmem %s3, 24
    %v1345 = vld [vmem:[%s1344] sm:$0xf]
    %v1346 = vld [vmem:[%s1344 + $0x4] sm:$0xf]
    %v1349 = vunpack.c.l.b16 %v1345
    %v1350 = vunpack.c.l.b16 %v1346
    %v1351 = vpack.c.b16 %v1350, %v1349
    %v1354 = vsel %vm503, %v1336, 0
    %v1357 = vsel %vm503, %v1337, 0
    %v1360 = vsel %vm503, %v1338, 0
    %v1363 = vsel %vm503, %v1339, 0
    %v1366 = vsel %vm503, %v1340, 0
    %v1369 = vsel %vm503, %v1341, 0
    %v1372 = vsel %vm503, %v1342, 0
    %v1375 = vsel %vm503, %v1343, 0
    %1377 = vmatprep.subr.bf16.mxu0 0
    %1378 = vmatpush1.bf16.msra.mxu0 0
    %1379 = vmatprep.subr.bf16.mxu0 0
    %1380 = vmatpush1.bf16.msra.mxu0 0
    %1381 = vmatprep.subr.bf16.mxu0 0
    %1382 = vmatpush1.bf16.msra.mxu0 0
    %1383 = vmatprep.subr.bf16.mxu0 0
    %1384 = vmatpush1.bf16.msra.mxu0 0
    %1385 = vmatprep.subr.bf16.mxu0 0
    %1386 = vmatpush1.bf16.msra.mxu0 0
    %1387 = vmatprep.subr.bf16.mxu0 0
    %1388 = vmatpush1.bf16.msra.mxu0 0
    %1389 = vmatprep.subr.bf16.mxu0 0
    %1390 = vmatpush1.bf16.msra.mxu0 0
    %1391 = vmatprep.subr.bf16.mxu0 0
    %1392 = vmatpush1.bf16.msra.mxu0 %v1351
    %1393 = vmatprep.subr.bf16.mxu0 0
    %1394 = vmatpush2.bf16.msra.mxu0 0
    %1395 = vmatprep.subr.bf16.mxu0 0
    %1396 = vmatpush2.bf16.msra.mxu0 0
    %1397 = vmatprep.subr.bf16.mxu0 0
    %1398 = vmatpush2.bf16.msra.mxu0 0
    %1399 = vmatprep.subr.bf16.mxu0 0
    %1400 = vmatpush2.bf16.msra.mxu0 0
    %1401 = vmatprep.subr.bf16.mxu0 0
    %1402 = vmatpush2.bf16.msra.mxu0 0
    %1403 = vmatprep.subr.bf16.mxu0 0
    %1404 = vmatpush2.bf16.msra.mxu0 0
    %1405 = vmatprep.subr.bf16.mxu0 0
    %1406 = vmatpush2.bf16.msra.mxu0 0
    %1407 = vmatprep.subr.bf16.mxu0 0
    %1408 = vmatpush2.bf16.msra.mxu0 0
    %1409 = vmatprep.mubr.bf16.mxu0 0
    %1410 = vmatmul.mubr.bf16.gmra.mxu0 %v1354
    %v1411 = vpop.f32.mrf.mxu0
    %v1412 = vadd.f32 0.0, %v1411
    %v1413 = vpop.f32.mrf.mxu0
    %v1414 = vpop.f32.mrf.mxu0
    %v1415 = vadd.f32 0.0, %v1414
    %v1416 = vpop.f32.mrf.mxu0
    %1417 = vmatprep.mubr.bf16.mxu0 0
    %1418 = vmatmul.mubr.bf16.gmra.mxu0 %v1357
    %v1419 = vpop.f32.mrf.mxu0
    %v1420 = vadd.f32 0.0, %v1419
    %v1421 = vpop.f32.mrf.mxu0
    %v1422 = vpop.f32.mrf.mxu0
    %v1423 = vadd.f32 0.0, %v1422
    %v1424 = vpop.f32.mrf.mxu0
    %1425 = vmatprep.mubr.bf16.mxu0 0
    %1426 = vmatmul.mubr.bf16.gmra.mxu0 %v1360
    %v1427 = vpop.f32.mrf.mxu0
    %v1428 = vadd.f32 0.0, %v1427
    %v1429 = vpop.f32.mrf.mxu0
    %v1430 = vpop.f32.mrf.mxu0
    %v1431 = vadd.f32 0.0, %v1430
    %v1432 = vpop.f32.mrf.mxu0
    %1433 = vmatprep.mubr.bf16.mxu0 0
    %1434 = vmatmul.mubr.bf16.gmra.mxu0 %v1363
    %v1435 = vpop.f32.mrf.mxu0
    %v1436 = vadd.f32 0.0, %v1435
    %v1437 = vpop.f32.mrf.mxu0
    %v1438 = vpop.f32.mrf.mxu0
    %v1439 = vadd.f32 0.0, %v1438
    %v1440 = vpop.f32.mrf.mxu0
    %1441 = vmatprep.mubr.bf16.mxu0 0
    %1442 = vmatmul.mubr.bf16.gmra.mxu0 %v1366
    %v1443 = vpop.f32.mrf.mxu0
    %v1444 = vadd.f32 0.0, %v1443
    %v1445 = vpop.f32.mrf.mxu0
    %v1446 = vpop.f32.mrf.mxu0
    %v1447 = vadd.f32 0.0, %v1446
    %v1448 = vpop.f32.mrf.mxu0
    %1449 = vmatprep.mubr.bf16.mxu0 0
    %1450 = vmatmul.mubr.bf16.gmra.mxu0 %v1369
    %v1451 = vpop.f32.mrf.mxu0
    %v1452 = vadd.f32 0.0, %v1451
    %v1453 = vpop.f32.mrf.mxu0
    %v1454 = vpop.f32.mrf.mxu0
    %v1455 = vadd.f32 0.0, %v1454
    %v1456 = vpop.f32.mrf.mxu0
    %1457 = vmatprep.mubr.bf16.mxu0 0
    %1458 = vmatmul.mubr.bf16.gmra.mxu0 %v1372
    %v1459 = vpop.f32.mrf.mxu0
    %v1460 = vadd.f32 0.0, %v1459
    %v1461 = vpop.f32.mrf.mxu0
    %v1462 = vpop.f32.mrf.mxu0
    %v1463 = vadd.f32 0.0, %v1462
    %v1464 = vpop.f32.mrf.mxu0
    %1465 = vmatprep.mubr.bf16.mxu0 0
    %1466 = vmatmul.mubr.bf16.gmra.mxu0 %v1375
    %v1467 = vpop.f32.mrf.mxu0
    %v1468 = vadd.f32 0.0, %v1467
    %v1469 = vpop.f32.mrf.mxu0
    %v1470 = vpop.f32.mrf.mxu0
    %v1471 = vadd.f32 0.0, %v1470
    %v1472 = vpop.f32.mrf.mxu0
    %1473 = vdwg.mxu0
    %v1474 = vpack.c.bf16 %v1415, %v1412
    %v1475 = vpack.c.bf16 %v1423, %v1420
    %v1476 = vpack.c.bf16 %v1431, %v1428
    %v1477 = vpack.c.bf16 %v1439, %v1436
    %v1478 = vpack.c.bf16 %v1447, %v1444
    %v1479 = vpack.c.bf16 %v1455, %v1452
    %v1480 = vpack.c.bf16 %v1463, %v1460
    %v1481 = vpack.c.bf16 %v1471, %v1468
    %s1482 = scalar_lea.vmem [#allocation4], 4
    %v1483 = vld [vmem:[%s1482] sm:$0x1]
    %v1485 = vlaneseq
    %v1486 = vshrl.u32 %v1485, 7
    %v1487 = vsub.s32 0, %v1486
    %v1488 = vrot.slane %v1483, %v1487
    %1490 = vmatprep.subr.bf16.mxu0 0
    %1491 = vmatpush1.bf16.msra.mxu0 %v1481
    %1492 = vmatprep.subr.bf16.mxu0 0
    %1493 = vmatpush1.bf16.msra.mxu0 %v1480
    %1494 = vmatprep.subr.bf16.mxu0 0
    %1495 = vmatpush1.bf16.msra.mxu0 %v1479
    %1496 = vmatprep.subr.bf16.mxu0 0
    %1497 = vmatpush1.bf16.msra.mxu0 %v1478
    %1498 = vmatprep.subr.bf16.mxu0 0
    %1499 = vmatpush1.bf16.msra.mxu0 %v1477
    %1500 = vmatprep.subr.bf16.mxu0 0
    %1501 = vmatpush1.bf16.msra.mxu0 %v1476
    %1502 = vmatprep.subr.bf16.mxu0 0
    %1503 = vmatpush1.bf16.msra.mxu0 %v1475
    %1504 = vmatprep.subr.bf16.mxu0 0
    %1505 = vmatpush1.bf16.msra.mxu0 %v1474
    %1506 = vmatprep.subr.bf16.mxu0 0
    %1507 = vmatpush2.bf16.msra.mxu0 0
    %1508 = vmatprep.subr.bf16.mxu0 0
    %1509 = vmatpush2.bf16.msra.mxu0 0
    %1510 = vmatprep.subr.bf16.mxu0 0
    %1511 = vmatpush2.bf16.msra.mxu0 0
    %1512 = vmatprep.subr.bf16.mxu0 0
    %1513 = vmatpush2.bf16.msra.mxu0 0
    %1514 = vmatprep.subr.bf16.mxu0 0
    %1515 = vmatpush2.bf16.msra.mxu0 0
    %1516 = vmatprep.subr.bf16.mxu0 0
    %1517 = vmatpush2.bf16.msra.mxu0 0
    %1518 = vmatprep.subr.bf16.mxu0 0
    %1519 = vmatpush2.bf16.msra.mxu0 0
    %1520 = vmatprep.subr.bf16.mxu0 0
    %1521 = vmatpush2.bf16.msra.mxu0 0
    %1522 = vmatprep.mubr.bf16.mxu0 0
    %1523 = vmatmul.mubr.bf16.gmra.mxu0 %v358
    %v1524 = vpop.f32.mrf.mxu0
    %v1525 = vadd.f32 %v1488, %v1524
    %v1526 = vpop.f32.mrf.mxu0
    %v1527 = vpop.f32.mrf.mxu0
    %v1528 = vadd.f32 %v1488, %v1527
    %v1529 = vpop.f32.mrf.mxu0
    %1530 = vmatprep.mubr.bf16.mxu0 0
    %1531 = vmatmul.mubr.bf16.gmra.mxu0 %v359
    %v1532 = vpop.f32.mrf.mxu0
    %v1533 = vadd.f32 %v1488, %v1532
    %v1534 = vpop.f32.mrf.mxu0
    %v1535 = vpop.f32.mrf.mxu0
    %v1536 = vadd.f32 %v1488, %v1535
    %v1537 = vpop.f32.mrf.mxu0
    %1538 = vmatprep.mubr.bf16.mxu0 0
    %1539 = vmatmul.mubr.bf16.gmra.mxu0 %v360
    %v1540 = vpop.f32.mrf.mxu0
    %v1541 = vadd.f32 %v1488, %v1540
    %v1542 = vpop.f32.mrf.mxu0
    %v1543 = vpop.f32.mrf.mxu0
    %v1544 = vadd.f32 %v1488, %v1543
    %v1545 = vpop.f32.mrf.mxu0
    %1546 = vmatprep.mubr.bf16.mxu0 0
    %1547 = vmatmul.mubr.bf16.gmra.mxu0 %v361
    %v1548 = vpop.f32.mrf.mxu0
    %v1549 = vadd.f32 %v1488, %v1548
    %v1550 = vpop.f32.mrf.mxu0
    %v1551 = vpop.f32.mrf.mxu0
    %v1552 = vadd.f32 %v1488, %v1551
    %v1553 = vpop.f32.mrf.mxu0
    %1554 = vmatprep.mubr.bf16.mxu0 0
    %1555 = vmatmul.mubr.bf16.gmra.mxu0 %v362
    %v1556 = vpop.f32.mrf.mxu0
    %v1557 = vadd.f32 %v1488, %v1556
    %v1558 = vpop.f32.mrf.mxu0
    %v1559 = vpop.f32.mrf.mxu0
    %v1560 = vadd.f32 %v1488, %v1559
    %v1561 = vpop.f32.mrf.mxu0
    %1562 = vmatprep.mubr.bf16.mxu0 0
    %1563 = vmatmul.mubr.bf16.gmra.mxu0 %v363
    %v1564 = vpop.f32.mrf.mxu0
    %v1565 = vadd.f32 %v1488, %v1564
    %v1566 = vpop.f32.mrf.mxu0
    %v1567 = vpop.f32.mrf.mxu0
    %v1568 = vadd.f32 %v1488, %v1567
    %v1569 = vpop.f32.mrf.mxu0
    %1570 = vmatprep.mubr.bf16.mxu0 0
    %1571 = vmatmul.mubr.bf16.gmra.mxu0 %v364
    %v1572 = vpop.f32.mrf.mxu0
    %v1573 = vadd.f32 %v1488, %v1572
    %v1574 = vpop.f32.mrf.mxu0
    %v1575 = vpop.f32.mrf.mxu0
    %v1576 = vadd.f32 %v1488, %v1575
    %v1577 = vpop.f32.mrf.mxu0
    %1578 = vmatprep.mubr.bf16.mxu0 0
    %1579 = vmatmul.mubr.bf16.gmra.mxu0 %v365
    %v1580 = vpop.f32.mrf.mxu0
    %v1581 = vadd.f32 %v1488, %v1580
    %v1582 = vpop.f32.mrf.mxu0
    %v1583 = vpop.f32.mrf.mxu0
    %v1584 = vadd.f32 %v1488, %v1583
    %v1585 = vpop.f32.mrf.mxu0
    %1586 = vdwg.mxu0
    %v1587 = vmax.f32 %v1525, 0.0
    %v1588 = vmax.f32 %v1528, 0.0
    %v1589 = vmax.f32 %v1533, 0.0
    %v1590 = vmax.f32 %v1536, 0.0
    %v1591 = vmax.f32 %v1541, 0.0
    %v1592 = vmax.f32 %v1544, 0.0
    %v1593 = vmax.f32 %v1549, 0.0
    %v1594 = vmax.f32 %v1552, 0.0
    %v1595 = vmax.f32 %v1557, 0.0
    %v1596 = vmax.f32 %v1560, 0.0
    %v1597 = vmax.f32 %v1565, 0.0
    %v1598 = vmax.f32 %v1568, 0.0
    %v1599 = vmax.f32 %v1573, 0.0
    %v1600 = vmax.f32 %v1576, 0.0
    %v1601 = vmax.f32 %v1581, 0.0
    %v1602 = vmax.f32 %v1584, 0.0
    %v1603 = vmax.f32 %v1320, %v1587
    %v1604 = vmax.f32 %v1321, %v1588
    %v1605 = vmax.f32 %v1322, %v1589
    %v1606 = vmax.f32 %v1323, %v1590
    %v1607 = vmax.f32 %v1324, %v1591
    %v1608 = vmax.f32 %v1325, %v1592
    %v1609 = vmax.f32 %v1326, %v1593
    %v1610 = vmax.f32 %v1327, %v1594
    %v1611 = vmax.f32 %v1328, %v1595
    %v1612 = vmax.f32 %v1329, %v1596
    %v1613 = vmax.f32 %v1330, %v1597
    %v1614 = vmax.f32 %v1331, %v1598
    %v1615 = vmax.f32 %v1332, %v1599
    %v1616 = vmax.f32 %v1333, %v1600
    %v1617 = vmax.f32 %v1334, %v1601
    %v1618 = vmax.f32 %v1335, %v1602
    %v1619 = vpack.c.bf16 %v1588, %v1587
    %v1620 = vpack.c.bf16 %v1590, %v1589
    %v1621 = vpack.c.bf16 %v1592, %v1591
    %v1622 = vpack.c.bf16 %v1594, %v1593
    %v1623 = vpack.c.bf16 %v1596, %v1595
    %v1624 = vpack.c.bf16 %v1598, %v1597
    %v1625 = vpack.c.bf16 %v1600, %v1599
    %v1626 = vpack.c.bf16 %v1602, %v1601
    %s1627 = scalar_lea.vmem %s3, 32
    %v1628 = vld [vmem:[%s1627] sm:$0xf]
    %v1629 = vld [vmem:[%s1627 + $0x4] sm:$0xf]
    %v1632 = vunpack.c.l.b16 %v1628
    %v1633 = vunpack.c.l.b16 %v1629
    %v1634 = vpack.c.b16 %v1633, %v1632
    %v1637 = vsel %vm503, %v1619, 0
    %v1640 = vsel %vm503, %v1620, 0
    %v1643 = vsel %vm503, %v1621, 0
    %v1646 = vsel %vm503, %v1622, 0
    %v1649 = vsel %vm503, %v1623, 0
    %v1652 = vsel %vm503, %v1624, 0
    %v1655 = vsel %vm503, %v1625, 0
    %v1658 = vsel %vm503, %v1626, 0
    %1660 = vmatprep.subr.bf16.mxu0 0
    %1661 = vmatpush1.bf16.msra.mxu0 0
    %1662 = vmatprep.subr.bf16.mxu0 0
    %1663 = vmatpush1.bf16.msra.mxu0 0
    %1664 = vmatprep.subr.bf16.mxu0 0
    %1665 = vmatpush1.bf16.msra.mxu0 0
    %1666 = vmatprep.subr.bf16.mxu0 0
    %1667 = vmatpush1.bf16.msra.mxu0 0
    %1668 = vmatprep.subr.bf16.mxu0 0
    %1669 = vmatpush1.bf16.msra.mxu0 0
    %1670 = vmatprep.subr.bf16.mxu0 0
    %1671 = vmatpush1.bf16.msra.mxu0 0
    %1672 = vmatprep.subr.bf16.mxu0 0
    %1673 = vmatpush1.bf16.msra.mxu0 0
    %1674 = vmatprep.subr.bf16.mxu0 0
    %1675 = vmatpush1.bf16.msra.mxu0 %v1634
    %1676 = vmatprep.subr.bf16.mxu0 0
    %1677 = vmatpush2.bf16.msra.mxu0 0
    %1678 = vmatprep.subr.bf16.mxu0 0
    %1679 = vmatpush2.bf16.msra.mxu0 0
    %1680 = vmatprep.subr.bf16.mxu0 0
    %1681 = vmatpush2.bf16.msra.mxu0 0
    %1682 = vmatprep.subr.bf16.mxu0 0
    %1683 = vmatpush2.bf16.msra.mxu0 0
    %1684 = vmatprep.subr.bf16.mxu0 0
    %1685 = vmatpush2.bf16.msra.mxu0 0
    %1686 = vmatprep.subr.bf16.mxu0 0
    %1687 = vmatpush2.bf16.msra.mxu0 0
    %1688 = vmatprep.subr.bf16.mxu0 0
    %1689 = vmatpush2.bf16.msra.mxu0 0
    %1690 = vmatprep.subr.bf16.mxu0 0
    %1691 = vmatpush2.bf16.msra.mxu0 0
    %1692 = vmatprep.mubr.bf16.mxu0 0
    %1693 = vmatmul.mubr.bf16.gmra.mxu0 %v1637
    %v1694 = vpop.f32.mrf.mxu0
    %v1695 = vadd.f32 0.0, %v1694
    %v1696 = vpop.f32.mrf.mxu0
    %v1697 = vpop.f32.mrf.mxu0
    %v1698 = vadd.f32 0.0, %v1697
    %v1699 = vpop.f32.mrf.mxu0
    %1700 = vmatprep.mubr.bf16.mxu0 0
    %1701 = vmatmul.mubr.bf16.gmra.mxu0 %v1640
    %v1702 = vpop.f32.mrf.mxu0
    %v1703 = vadd.f32 0.0, %v1702
    %v1704 = vpop.f32.mrf.mxu0
    %v1705 = vpop.f32.mrf.mxu0
    %v1706 = vadd.f32 0.0, %v1705
    %v1707 = vpop.f32.mrf.mxu0
    %1708 = vmatprep.mubr.bf16.mxu0 0
    %1709 = vmatmul.mubr.bf16.gmra.mxu0 %v1643
    %v1710 = vpop.f32.mrf.mxu0
    %v1711 = vadd.f32 0.0, %v1710
    %v1712 = vpop.f32.mrf.mxu0
    %v1713 = vpop.f32.mrf.mxu0
    %v1714 = vadd.f32 0.0, %v1713
    %v1715 = vpop.f32.mrf.mxu0
    %1716 = vmatprep.mubr.bf16.mxu0 0
    %1717 = vmatmul.mubr.bf16.gmra.mxu0 %v1646
    %v1718 = vpop.f32.mrf.mxu0
    %v1719 = vadd.f32 0.0, %v1718
    %v1720 = vpop.f32.mrf.mxu0
    %v1721 = vpop.f32.mrf.mxu0
    %v1722 = vadd.f32 0.0, %v1721
    %v1723 = vpop.f32.mrf.mxu0
    %1724 = vmatprep.mubr.bf16.mxu0 0
    %1725 = vmatmul.mubr.bf16.gmra.mxu0 %v1649
    %v1726 = vpop.f32.mrf.mxu0
    %v1727 = vadd.f32 0.0, %v1726
    %v1728 = vpop.f32.mrf.mxu0
    %v1729 = vpop.f32.mrf.mxu0
    %v1730 = vadd.f32 0.0, %v1729
    %v1731 = vpop.f32.mrf.mxu0
    %1732 = vmatprep.mubr.bf16.mxu0 0
    %1733 = vmatmul.mubr.bf16.gmra.mxu0 %v1652
    %v1734 = vpop.f32.mrf.mxu0
    %v1735 = vadd.f32 0.0, %v1734
    %v1736 = vpop.f32.mrf.mxu0
    %v1737 = vpop.f32.mrf.mxu0
    %v1738 = vadd.f32 0.0, %v1737
    %v1739 = vpop.f32.mrf.mxu0
    %1740 = vmatprep.mubr.bf16.mxu0 0
    %1741 = vmatmul.mubr.bf16.gmra.mxu0 %v1655
    %v1742 = vpop.f32.mrf.mxu0
    %v1743 = vadd.f32 0.0, %v1742
    %v1744 = vpop.f32.mrf.mxu0
    %v1745 = vpop.f32.mrf.mxu0
    %v1746 = vadd.f32 0.0, %v1745
    %v1747 = vpop.f32.mrf.mxu0
    %1748 = vmatprep.mubr.bf16.mxu0 0
    %1749 = vmatmul.mubr.bf16.gmra.mxu0 %v1658
    %v1750 = vpop.f32.mrf.mxu0
    %v1751 = vadd.f32 0.0, %v1750
    %v1752 = vpop.f32.mrf.mxu0
    %v1753 = vpop.f32.mrf.mxu0
    %v1754 = vadd.f32 0.0, %v1753
    %v1755 = vpop.f32.mrf.mxu0
    %1756 = vdwg.mxu0
    %v1757 = vpack.c.bf16 %v1698, %v1695
    %v1758 = vpack.c.bf16 %v1706, %v1703
    %v1759 = vpack.c.bf16 %v1714, %v1711
    %v1760 = vpack.c.bf16 %v1722, %v1719
    %v1761 = vpack.c.bf16 %v1730, %v1727
    %v1762 = vpack.c.bf16 %v1738, %v1735
    %v1763 = vpack.c.bf16 %v1746, %v1743
    %v1764 = vpack.c.bf16 %v1754, %v1751
    %s1765 = scalar_lea.vmem [#allocation4], 5
    %v1766 = vld [vmem:[%s1765] sm:$0x1]
    %v1768 = vlaneseq
    %v1769 = vshrl.u32 %v1768, 7
    %v1770 = vsub.s32 0, %v1769
    %v1771 = vrot.slane %v1766, %v1770
    %1773 = vmatprep.subr.bf16.mxu0 0
    %1774 = vmatpush1.bf16.msra.mxu0 %v1764
    %1775 = vmatprep.subr.bf16.mxu0 0
    %1776 = vmatpush1.bf16.msra.mxu0 %v1763
    %1777 = vmatprep.subr.bf16.mxu0 0
    %1778 = vmatpush1.bf16.msra.mxu0 %v1762
    %1779 = vmatprep.subr.bf16.mxu0 0
    %1780 = vmatpush1.bf16.msra.mxu0 %v1761
    %1781 = vmatprep.subr.bf16.mxu0 0
    %1782 = vmatpush1.bf16.msra.mxu0 %v1760
    %1783 = vmatprep.subr.bf16.mxu0 0
    %1784 = vmatpush1.bf16.msra.mxu0 %v1759
    %1785 = vmatprep.subr.bf16.mxu0 0
    %1786 = vmatpush1.bf16.msra.mxu0 %v1758
    %1787 = vmatprep.subr.bf16.mxu0 0
    %1788 = vmatpush1.bf16.msra.mxu0 %v1757
    %1789 = vmatprep.subr.bf16.mxu0 0
    %1790 = vmatpush2.bf16.msra.mxu0 0
    %1791 = vmatprep.subr.bf16.mxu0 0
    %1792 = vmatpush2.bf16.msra.mxu0 0
    %1793 = vmatprep.subr.bf16.mxu0 0
    %1794 = vmatpush2.bf16.msra.mxu0 0
    %1795 = vmatprep.subr.bf16.mxu0 0
    %1796 = vmatpush2.bf16.msra.mxu0 0
    %1797 = vmatprep.subr.bf16.mxu0 0
    %1798 = vmatpush2.bf16.msra.mxu0 0
    %1799 = vmatprep.subr.bf16.mxu0 0
    %1800 = vmatpush2.bf16.msra.mxu0 0
    %1801 = vmatprep.subr.bf16.mxu0 0
    %1802 = vmatpush2.bf16.msra.mxu0 0
    %1803 = vmatprep.subr.bf16.mxu0 0
    %1804 = vmatpush2.bf16.msra.mxu0 0
    %1805 = vmatprep.mubr.bf16.mxu0 0
    %1806 = vmatmul.mubr.bf16.gmra.mxu0 %v358
    %v1807 = vpop.f32.mrf.mxu0
    %v1808 = vadd.f32 %v1771, %v1807
    %v1809 = vpop.f32.mrf.mxu0
    %v1810 = vpop.f32.mrf.mxu0
    %v1811 = vadd.f32 %v1771, %v1810
    %v1812 = vpop.f32.mrf.mxu0
    %1813 = vmatprep.mubr.bf16.mxu0 0
    %1814 = vmatmul.mubr.bf16.gmra.mxu0 %v359
    %v1815 = vpop.f32.mrf.mxu0
    %v1816 = vadd.f32 %v1771, %v1815
    %v1817 = vpop.f32.mrf.mxu0
    %v1818 = vpop.f32.mrf.mxu0
    %v1819 = vadd.f32 %v1771, %v1818
    %v1820 = vpop.f32.mrf.mxu0
    %1821 = vmatprep.mubr.bf16.mxu0 0
    %1822 = vmatmul.mubr.bf16.gmra.mxu0 %v360
    %v1823 = vpop.f32.mrf.mxu0
    %v1824 = vadd.f32 %v1771, %v1823
    %v1825 = vpop.f32.mrf.mxu0
    %v1826 = vpop.f32.mrf.mxu0
    %v1827 = vadd.f32 %v1771, %v1826
    %v1828 = vpop.f32.mrf.mxu0
    %1829 = vmatprep.mubr.bf16.mxu0 0
    %1830 = vmatmul.mubr.bf16.gmra.mxu0 %v361
    %v1831 = vpop.f32.mrf.mxu0
    %v1832 = vadd.f32 %v1771, %v1831
    %v1833 = vpop.f32.mrf.mxu0
    %v1834 = vpop.f32.mrf.mxu0
    %v1835 = vadd.f32 %v1771, %v1834
    %v1836 = vpop.f32.mrf.mxu0
    %1837 = vmatprep.mubr.bf16.mxu0 0
    %1838 = vmatmul.mubr.bf16.gmra.mxu0 %v362
    %v1839 = vpop.f32.mrf.mxu0
    %v1840 = vadd.f32 %v1771, %v1839
    %v1841 = vpop.f32.mrf.mxu0
    %v1842 = vpop.f32.mrf.mxu0
    %v1843 = vadd.f32 %v1771, %v1842
    %v1844 = vpop.f32.mrf.mxu0
    %1845 = vmatprep.mubr.bf16.mxu0 0
    %1846 = vmatmul.mubr.bf16.gmra.mxu0 %v363
    %v1847 = vpop.f32.mrf.mxu0
    %v1848 = vadd.f32 %v1771, %v1847
    %v1849 = vpop.f32.mrf.mxu0
    %v1850 = vpop.f32.mrf.mxu0
    %v1851 = vadd.f32 %v1771, %v1850
    %v1852 = vpop.f32.mrf.mxu0
    %1853 = vmatprep.mubr.bf16.mxu0 0
    %1854 = vmatmul.mubr.bf16.gmra.mxu0 %v364
    %v1855 = vpop.f32.mrf.mxu0
    %v1856 = vadd.f32 %v1771, %v1855
    %v1857 = vpop.f32.mrf.mxu0
    %v1858 = vpop.f32.mrf.mxu0
    %v1859 = vadd.f32 %v1771, %v1858
    %v1860 = vpop.f32.mrf.mxu0
    %1861 = vmatprep.mubr.bf16.mxu0 0
    %1862 = vmatmul.mubr.bf16.gmra.mxu0 %v365
    %v1863 = vpop.f32.mrf.mxu0
    %v1864 = vadd.f32 %v1771, %v1863
    %v1865 = vpop.f32.mrf.mxu0
    %v1866 = vpop.f32.mrf.mxu0
    %v1867 = vadd.f32 %v1771, %v1866
    %v1868 = vpop.f32.mrf.mxu0
    %1869 = vdwg.mxu0
    %v1870 = vmax.f32 %v1808, 0.0
    %v1871 = vmax.f32 %v1811, 0.0
    %v1872 = vmax.f32 %v1816, 0.0
    %v1873 = vmax.f32 %v1819, 0.0
    %v1874 = vmax.f32 %v1824, 0.0
    %v1875 = vmax.f32 %v1827, 0.0
    %v1876 = vmax.f32 %v1832, 0.0
    %v1877 = vmax.f32 %v1835, 0.0
    %v1878 = vmax.f32 %v1840, 0.0
    %v1879 = vmax.f32 %v1843, 0.0
    %v1880 = vmax.f32 %v1848, 0.0
    %v1881 = vmax.f32 %v1851, 0.0
    %v1882 = vmax.f32 %v1856, 0.0
    %v1883 = vmax.f32 %v1859, 0.0
    %v1884 = vmax.f32 %v1864, 0.0
    %v1885 = vmax.f32 %v1867, 0.0
    %v1886 = vmax.f32 %v1603, %v1870
    %v1887 = vmax.f32 %v1604, %v1871
    %v1888 = vmax.f32 %v1605, %v1872
    %v1889 = vmax.f32 %v1606, %v1873
    %v1890 = vmax.f32 %v1607, %v1874
    %v1891 = vmax.f32 %v1608, %v1875
    %v1892 = vmax.f32 %v1609, %v1876
    %v1893 = vmax.f32 %v1610, %v1877
    %v1894 = vmax.f32 %v1611, %v1878
    %v1895 = vmax.f32 %v1612, %v1879
    %v1896 = vmax.f32 %v1613, %v1880
    %v1897 = vmax.f32 %v1614, %v1881
    %v1898 = vmax.f32 %v1615, %v1882
    %v1899 = vmax.f32 %v1616, %v1883
    %v1900 = vmax.f32 %v1617, %v1884
    %v1901 = vmax.f32 %v1618, %v1885
    %v1902 = vpack.c.bf16 %v1887, %v1886
    %v1903 = vpack.c.bf16 %v1889, %v1888
    %v1904 = vpack.c.bf16 %v1891, %v1890
    %v1905 = vpack.c.bf16 %v1893, %v1892
    %v1906 = vpack.c.bf16 %v1895, %v1894
    %v1907 = vpack.c.bf16 %v1897, %v1896
    %v1908 = vpack.c.bf16 %v1899, %v1898
    %v1909 = vpack.c.bf16 %v1901, %v1900
    %v1910 = vld [vmem:[%s5] sm:$0xf]
    %v1911 = vld [vmem:[%s5 + $0x4] sm:$0xf]
    %v1912 = vld [vmem:[%s6] sm:$0x1]
    %v1914 = vlaneseq
    %v1915 = vshrl.u32 %v1914, 7
    %v1916 = vsub.s32 0, %v1915
    %v1917 = vrot.slane %v1912, %v1916
    %v1921 = vunpack.c.l.b16 %v1910
    %v1922 = vunpack.c.l.b16 %v1911
    %v1923 = vpack.c.b16 %v1922, %v1921
    %v1926 = vsel %vm503, %v1902, 0
    %v1929 = vsel %vm503, %v1903, 0
    %v1932 = vsel %vm503, %v1904, 0
    %v1935 = vsel %vm503, %v1905, 0
    %v1938 = vsel %vm503, %v1906, 0
    %v1941 = vsel %vm503, %v1907, 0
    %v1944 = vsel %vm503, %v1908, 0
    %v1947 = vsel %vm503, %v1909, 0
    %1949 = vmatprep.subr.bf16.mxu0 0
    %1950 = vmatpush1.bf16.msra.mxu0 0
    %1951 = vmatprep.subr.bf16.mxu0 0
    %1952 = vmatpush1.bf16.msra.mxu0 0
    %1953 = vmatprep.subr.bf16.mxu0 0
    %1954 = vmatpush1.bf16.msra.mxu0 0
    %1955 = vmatprep.subr.bf16.mxu0 0
    %1956 = vmatpush1.bf16.msra.mxu0 0
    %1957 = vmatprep.subr.bf16.mxu0 0
    %1958 = vmatpush1.bf16.msra.mxu0 0
    %1959 = vmatprep.subr.bf16.mxu0 0
    %1960 = vmatpush1.bf16.msra.mxu0 0
    %1961 = vmatprep.subr.bf16.mxu0 0
    %1962 = vmatpush1.bf16.msra.mxu0 0
    %1963 = vmatprep.subr.bf16.mxu0 0
    %1964 = vmatpush1.bf16.msra.mxu0 %v1923
    %1965 = vmatprep.subr.bf16.mxu0 0
    %1966 = vmatpush2.bf16.msra.mxu0 0
    %1967 = vmatprep.subr.bf16.mxu0 0
    %1968 = vmatpush2.bf16.msra.mxu0 0
    %1969 = vmatprep.subr.bf16.mxu0 0
    %1970 = vmatpush2.bf16.msra.mxu0 0
    %1971 = vmatprep.subr.bf16.mxu0 0
    %1972 = vmatpush2.bf16.msra.mxu0 0
    %1973 = vmatprep.subr.bf16.mxu0 0
    %1974 = vmatpush2.bf16.msra.mxu0 0
    %1975 = vmatprep.subr.bf16.mxu0 0
    %1976 = vmatpush2.bf16.msra.mxu0 0
    %1977 = vmatprep.subr.bf16.mxu0 0
    %1978 = vmatpush2.bf16.msra.mxu0 0
    %1979 = vmatprep.subr.bf16.mxu0 0
    %1980 = vmatpush2.bf16.msra.mxu0 0
    %1981 = vmatprep.mubr.bf16.mxu0 0
    %1982 = vmatmul.mubr.bf16.gmra.mxu0 %v1926
    %v1983 = vpop.f32.mrf.mxu0
    %v1984 = vadd.f32 %v1917, %v1983
    %v1985 = vpop.f32.mrf.mxu0
    %v1986 = vpop.f32.mrf.mxu0
    %v1987 = vadd.f32 %v1917, %v1986
    %v1988 = vpop.f32.mrf.mxu0
    %1989 = vmatprep.mubr.bf16.mxu0 0
    %1990 = vmatmul.mubr.bf16.gmra.mxu0 %v1929
    %v1991 = vpop.f32.mrf.mxu0
    %v1992 = vadd.f32 %v1917, %v1991
    %v1993 = vpop.f32.mrf.mxu0
    %v1994 = vpop.f32.mrf.mxu0
    %v1995 = vadd.f32 %v1917, %v1994
    %v1996 = vpop.f32.mrf.mxu0
    %1997 = vmatprep.mubr.bf16.mxu0 0
    %1998 = vmatmul.mubr.bf16.gmra.mxu0 %v1932
    %v1999 = vpop.f32.mrf.mxu0
    %v2000 = vadd.f32 %v1917, %v1999
    %v2001 = vpop.f32.mrf.mxu0
    %v2002 = vpop.f32.mrf.mxu0
    %v2003 = vadd.f32 %v1917, %v2002
    %v2004 = vpop.f32.mrf.mxu0
    %2005 = vmatprep.mubr.bf16.mxu0 0
    %2006 = vmatmul.mubr.bf16.gmra.mxu0 %v1935
    %v2007 = vpop.f32.mrf.mxu0
    %v2008 = vadd.f32 %v1917, %v2007
    %v2009 = vpop.f32.mrf.mxu0
    %v2010 = vpop.f32.mrf.mxu0
    %v2011 = vadd.f32 %v1917, %v2010
    %v2012 = vpop.f32.mrf.mxu0
    %2013 = vmatprep.mubr.bf16.mxu0 0
    %2014 = vmatmul.mubr.bf16.gmra.mxu0 %v1938
    %v2015 = vpop.f32.mrf.mxu0
    %v2016 = vadd.f32 %v1917, %v2015
    %v2017 = vpop.f32.mrf.mxu0
    %v2018 = vpop.f32.mrf.mxu0
    %v2019 = vadd.f32 %v1917, %v2018
    %v2020 = vpop.f32.mrf.mxu0
    %2021 = vmatprep.mubr.bf16.mxu0 0
    %2022 = vmatmul.mubr.bf16.gmra.mxu0 %v1941
    %v2023 = vpop.f32.mrf.mxu0
    %v2024 = vadd.f32 %v1917, %v2023
    %v2025 = vpop.f32.mrf.mxu0
    %v2026 = vpop.f32.mrf.mxu0
    %v2027 = vadd.f32 %v1917, %v2026
    %v2028 = vpop.f32.mrf.mxu0
    %2029 = vmatprep.mubr.bf16.mxu0 0
    %2030 = vmatmul.mubr.bf16.gmra.mxu0 %v1944
    %v2031 = vpop.f32.mrf.mxu0
    %v2032 = vadd.f32 %v1917, %v2031
    %v2033 = vpop.f32.mrf.mxu0
    %v2034 = vpop.f32.mrf.mxu0
    %v2035 = vadd.f32 %v1917, %v2034
    %v2036 = vpop.f32.mrf.mxu0
    %2037 = vmatprep.mubr.bf16.mxu0 0
    %2038 = vmatmul.mubr.bf16.gmra.mxu0 %v1947
    %v2039 = vpop.f32.mrf.mxu0
    %v2040 = vadd.f32 %v1917, %v2039
    %v2041 = vpop.f32.mrf.mxu0
    %v2042 = vpop.f32.mrf.mxu0
    %v2043 = vadd.f32 %v1917, %v2042
    %v2044 = vpop.f32.mrf.mxu0
    %2045 = vdwg.mxu0
    %2046 = vmax.xlane.f32.xlu0 %v1984
    %v2047 = vpop.xlane.xlu0 %2046
    %2048 = vmax.xlane.f32.xlu0 %v1987
    %v2049 = vpop.xlane.xlu0 %2048
    %2050 = vmax.xlane.f32.xlu0 %v1992
    %v2051 = vpop.xlane.xlu0 %2050
    %2052 = vmax.xlane.f32.xlu0 %v1995
    %v2053 = vpop.xlane.xlu0 %2052
    %2054 = vmax.xlane.f32.xlu0 %v2000
    %v2055 = vpop.xlane.xlu0 %2054
    %2056 = vmax.xlane.f32.xlu0 %v2003
    %v2057 = vpop.xlane.xlu0 %2056
    %2058 = vmax.xlane.f32.xlu0 %v2008
    %v2059 = vpop.xlane.xlu0 %2058
    %2060 = vmax.xlane.f32.xlu0 %v2011
    %v2061 = vpop.xlane.xlu0 %2060
    %2062 = vmax.xlane.f32.xlu0 %v2016
    %v2063 = vpop.xlane.xlu0 %2062
    %2064 = vmax.xlane.f32.xlu0 %v2019
    %v2065 = vpop.xlane.xlu0 %2064
    %2066 = vmax.xlane.f32.xlu0 %v2024
    %v2067 = vpop.xlane.xlu0 %2066
    %2068 = vmax.xlane.f32.xlu0 %v2027
    %v2069 = vpop.xlane.xlu0 %2068
    %2070 = vmax.xlane.f32.xlu0 %v2032
    %v2071 = vpop.xlane.xlu0 %2070
    %2072 = vmax.xlane.f32.xlu0 %v2035
    %v2073 = vpop.xlane.xlu0 %2072
    %2074 = vmax.xlane.f32.xlu0 %v2040
    %v2075 = vpop.xlane.xlu0 %2074
    %2076 = vmax.xlane.f32.xlu0 %v2043
    %v2077 = vpop.xlane.xlu0 %2076
    %v2078 = vsub.f32 %v1984, %v2047
    %v2079 = vsub.f32 %v1987, %v2049
    %v2080 = vsub.f32 %v1992, %v2051
    %v2081 = vsub.f32 %v1995, %v2053
    %v2082 = vsub.f32 %v2000, %v2055
    %v2083 = vsub.f32 %v2003, %v2057
    %v2084 = vsub.f32 %v2008, %v2059
    %v2085 = vsub.f32 %v2011, %v2061
    %v2086 = vsub.f32 %v2016, %v2063
    %v2087 = vsub.f32 %v2019, %v2065
    %v2088 = vsub.f32 %v2024, %v2067
    %v2089 = vsub.f32 %v2027, %v2069
    %v2090 = vsub.f32 %v2032, %v2071
    %v2091 = vsub.f32 %v2035, %v2073
    %v2092 = vsub.f32 %v2040, %v2075
    %v2093 = vsub.f32 %v2043, %v2077
    %v2094 = vmul.f32 %v2078, 1.442695
    %v2095 = vpow.pop %v2094
    %v2096 = vmul.f32 %v2079, 1.442695
    %v2097 = vpow.pop %v2096
    %v2098 = vmul.f32 %v2080, 1.442695
    %v2099 = vpow.pop %v2098
    %v2100 = vmul.f32 %v2081, 1.442695
    %v2101 = vpow.pop %v2100
    %v2102 = vmul.f32 %v2082, 1.442695
    %v2103 = vpow.pop %v2102
    %v2104 = vmul.f32 %v2083, 1.442695
    %v2105 = vpow.pop %v2104
    %v2106 = vmul.f32 %v2084, 1.442695
    %v2107 = vpow.pop %v2106
    %v2108 = vmul.f32 %v2085, 1.442695
    %v2109 = vpow.pop %v2108
    %v2110 = vmul.f32 %v2086, 1.442695
    %v2111 = vpow.pop %v2110
    %v2112 = vmul.f32 %v2087, 1.442695
    %v2113 = vpow.pop %v2112
    %v2114 = vmul.f32 %v2088, 1.442695
    %v2115 = vpow.pop %v2114
    %v2116 = vmul.f32 %v2089, 1.442695
    %v2117 = vpow.pop %v2116
    %v2118 = vmul.f32 %v2090, 1.442695
    %v2119 = vpow.pop %v2118
    %v2120 = vmul.f32 %v2091, 1.442695
    %v2121 = vpow.pop %v2120
    %v2122 = vmul.f32 %v2092, 1.442695
    %v2123 = vpow.pop %v2122
    %v2124 = vmul.f32 %v2093, 1.442695
    %v2125 = vpow.pop %v2124
    %2126 = vadd.xlane.f32.xlu0 %v2095
    %v2127 = vpop.xlane.xlu0 %2126
    %2128 = vadd.xlane.f32.xlu0 %v2097
    %v2129 = vpop.xlane.xlu0 %2128
    %2130 = vadd.xlane.f32.xlu0 %v2099
    %v2131 = vpop.xlane.xlu0 %2130
    %2132 = vadd.xlane.f32.xlu0 %v2101
    %v2133 = vpop.xlane.xlu0 %2132
    %2134 = vadd.xlane.f32.xlu0 %v2103
    %v2135 = vpop.xlane.xlu0 %2134
    %2136 = vadd.xlane.f32.xlu0 %v2105
    %v2137 = vpop.xlane.xlu0 %2136
    %2138 = vadd.xlane.f32.xlu0 %v2107
    %v2139 = vpop.xlane.xlu0 %2138
    %2140 = vadd.xlane.f32.xlu0 %v2109
    %v2141 = vpop.xlane.xlu0 %2140
    %2142 = vadd.xlane.f32.xlu0 %v2111
    %v2143 = vpop.xlane.xlu0 %2142
    %2144 = vadd.xlane.f32.xlu0 %v2113
    %v2145 = vpop.xlane.xlu0 %2144
    %2146 = vadd.xlane.f32.xlu0 %v2115
    %v2147 = vpop.xlane.xlu0 %2146
    %2148 = vadd.xlane.f32.xlu0 %v2117
    %v2149 = vpop.xlane.xlu0 %2148
    %2150 = vadd.xlane.f32.xlu0 %v2119
    %v2151 = vpop.xlane.xlu0 %2150
    %2152 = vadd.xlane.f32.xlu0 %v2121
    %v2153 = vpop.xlane.xlu0 %2152
    %2154 = vadd.xlane.f32.xlu0 %v2123
    %v2155 = vpop.xlane.xlu0 %2154
    %2156 = vadd.xlane.f32.xlu0 %v2125
    %v2157 = vpop.xlane.xlu0 %2156
    %v2158 = vlog2.pop %v2127
    %v2159 = vmul.f32 %v2158, 0.6931472
    %v2160 = vlog2.pop %v2129
    %v2161 = vmul.f32 %v2160, 0.6931472
    %v2162 = vlog2.pop %v2131
    %v2163 = vmul.f32 %v2162, 0.6931472
    %v2164 = vlog2.pop %v2133
    %v2165 = vmul.f32 %v2164, 0.6931472
    %v2166 = vlog2.pop %v2135
    %v2167 = vmul.f32 %v2166, 0.6931472
    %v2168 = vlog2.pop %v2137
    %v2169 = vmul.f32 %v2168, 0.6931472
    %v2170 = vlog2.pop %v2139
    %v2171 = vmul.f32 %v2170, 0.6931472
    %v2172 = vlog2.pop %v2141
    %v2173 = vmul.f32 %v2172, 0.6931472
    %v2174 = vlog2.pop %v2143
    %v2175 = vmul.f32 %v2174, 0.6931472
    %v2176 = vlog2.pop %v2145
    %v2177 = vmul.f32 %v2176, 0.6931472
    %v2178 = vlog2.pop %v2147
    %v2179 = vmul.f32 %v2178, 0.6931472
    %v2180 = vlog2.pop %v2149
    %v2181 = vmul.f32 %v2180, 0.6931472
    %v2182 = vlog2.pop %v2151
    %v2183 = vmul.f32 %v2182, 0.6931472
    %v2184 = vlog2.pop %v2153
    %v2185 = vmul.f32 %v2184, 0.6931472
    %v2186 = vlog2.pop %v2155
    %v2187 = vmul.f32 %v2186, 0.6931472
    %v2188 = vlog2.pop %v2157
    %v2189 = vmul.f32 %v2188, 0.6931472
    %v2190 = vadd.f32 %v2047, %v2159
    %v2191 = vadd.f32 %v2049, %v2161
    %v2192 = vadd.f32 %v2051, %v2163
    %v2193 = vadd.f32 %v2053, %v2165
    %v2194 = vadd.f32 %v2055, %v2167
    %v2195 = vadd.f32 %v2057, %v2169
    %v2196 = vadd.f32 %v2059, %v2171
    %v2197 = vadd.f32 %v2061, %v2173
    %v2198 = vadd.f32 %v2063, %v2175
    %v2199 = vadd.f32 %v2065, %v2177
    %v2200 = vadd.f32 %v2067, %v2179
    %v2201 = vadd.f32 %v2069, %v2181
    %v2202 = vadd.f32 %v2071, %v2183
    %v2203 = vadd.f32 %v2073, %v2185
    %v2204 = vadd.f32 %v2075, %v2187
    %v2205 = vadd.f32 %v2077, %v2189
    %v2206 = vsub.f32 %v1984, %v2190
    %v2207 = vsub.f32 %v1987, %v2191
    %v2208 = vsub.f32 %v1992, %v2192
    %v2209 = vsub.f32 %v1995, %v2193
    %v2210 = vsub.f32 %v2000, %v2194
    %v2211 = vsub.f32 %v2003, %v2195
    %v2212 = vsub.f32 %v2008, %v2196
    %v2213 = vsub.f32 %v2011, %v2197
    %v2214 = vsub.f32 %v2016, %v2198
    %v2215 = vsub.f32 %v2019, %v2199
    %v2216 = vsub.f32 %v2024, %v2200
    %v2217 = vsub.f32 %v2027, %v2201
    %v2218 = vsub.f32 %v2032, %v2202
    %v2219 = vsub.f32 %v2035, %v2203
    %v2220 = vsub.f32 %v2040, %v2204
    %v2221 = vsub.f32 %v2043, %v2205
    %2222 = vst [vmem:[#allocation7] sm:$0xff] %v2206
    %2223 = vst [vmem:[#allocation7 + $0x8] sm:$0xff] %v2207
    %2224 = vst [vmem:[#allocation7 + $0x10] sm:$0xff] %v2208
    %2225 = vst [vmem:[#allocation7 + $0x18] sm:$0xff] %v2209
    %2226 = vst [vmem:[#allocation7 + $0x20] sm:$0xff] %v2210
    %2227 = vst [vmem:[#allocation7 + $0x28] sm:$0xff] %v2211
    %2228 = vst [vmem:[#allocation7 + $0x30] sm:$0xff] %v2212
    %2229 = vst [vmem:[#allocation7 + $0x38] sm:$0xff] %v2213
    %2230 = vst [vmem:[#allocation7 + $0x40] sm:$0xff] %v2214
    %2231 = vst [vmem:[#allocation7 + $0x48] sm:$0xff] %v2215
    %2232 = vst [vmem:[#allocation7 + $0x50] sm:$0xff] %v2216
    %2233 = vst [vmem:[#allocation7 + $0x58] sm:$0xff] %v2217
    %2234 = vst [vmem:[#allocation7 + $0x60] sm:$0xff] %v2218
    %2235 = vst [vmem:[#allocation7 + $0x68] sm:$0xff] %v2219
    %2236 = vst [vmem:[#allocation7 + $0x70] sm:$0xff] %v2220
    %2237 = vst [vmem:[#allocation7 + $0x78] sm:$0xff] %v2221
    // Predicated region
    $region64: #{_fused_forward.1} parent=1 // pred_check
      _
    $region65: #{_fused_forward.1} parent=1 // pred_check_branch
      %2239 = sbr.rel (0) target = $region67
    $region66: #{_fused_forward.1} parent=1 // pred_region
      %s2241 = ssub.s32 2048, 2048
      %2242 = vsyncadd [#allocation6], %s2241
      %s2243 = sshll.u32 [#allocation7], 4
      %s2244 = int_to_ptr.vmem [resolvable:$true] %s2243
      %2249 = dma.vmem_to_hbm [thread:$0]  %s2244, 2048, %s7, [#allocation6], 128, 128, 8
    $region67: #{_fused_forward.1} parent=1 // pred_fallthru
      _
    // Predicated region
    $region68: #{_fused_forward.1} parent=1 // pred_check
      _
    $region69: #{_fused_forward.1} parent=1 // pred_check_branch
      %2251 = sbr.rel (0) target = $region71
    $region70: #{_fused_forward.1} parent=1 // pred_region
      %2252 = dma.done [#allocation6], 2048
    $region71: #{_fused_forward.1} parent=1 // pred_fallthru
      _
    %2253 = vsyncpa [#allocation5], 1
    %2254 = vsyncpa [#allocation6], 1
  %2255 = vsyncmov [#allocation3]
  %s2256 = vpop.sfrf %2255
  %p2257 = scmp.eq.s32.totalorder %s2256, 0
  %p2258 = pneg %p2257
  %2260 = shalt.err (%p2258)

</llo_original>
